<compile_context>
chip_gen: v6e
topology: v6e:2x2x1
jax: 0.10.0
libtpu: 0.0.40
codegen_flags: <defaults>
</compile_context>

<pallas_src>
import math

import jax
import jax.numpy as jnp
from jax.experimental import pallas as pl
from jax.experimental.pallas import tpu as pltpu


def _round_up(n, m):
    return ((n + m - 1) // m) * m


def _compose_kernel(x_ref, w1_ref, w2_ref, o_ref):
    # In-kernel cast of the node tile to the compute dtype (no-op on f32 path).
    x = x_ref[...].astype(w1_ref.dtype)
    # --- first sub-module: Linear (Din -> H); fan-in scale pre-folded into w1.
    h = jnp.dot(x, w1_ref[...], preferred_element_type=jnp.float32)
    # Feed `first`'s output straight into `second` (stays in VMEM/vregs).
    # Keep h in f32: the kernel is memory-bound, the extra MXU cost is hidden,
    # and it avoids compounding bf16 rounding through both layers.
    # --- second sub-module: Linear (H -> Dout); fan-in scale pre-folded into w2.
    y = jnp.dot(h, w2_ref[...].astype(jnp.float32),
                preferred_element_type=jnp.float32)
    o_ref[...] = y.astype(o_ref.dtype)


def _target_steps():
    """>=4 grid steps on v7x (2 TensorCores); ~2 bigger steps on v5e/v6e."""
    try:
        kind = jax.devices()[0].device_kind.lower()
        if "7" in kind:
            return 4
        return 2
    except Exception:
        return 4  # safe default: keeps both cores busy if this is a 2-TC chip


def _auto_tile_m(n, align, target_steps, max_tile=8192):
    tile = _round_up(max(pl.cdiv(n, target_steps), align), align)
    tile = min(tile, max_tile)                 # stays far below scoped VMEM on all gens
    tile = min(tile, _round_up(n, align))      # never bigger than the problem
    return max(tile, align)


def compose_forward(x, w1, w2, *, tile_m=None, compute_dtype=None, out_dtype=None):
    """Fused Compose(Linear, Linear) forward.

    x  : [N, Din]   node features (read directly; cast to compute_dtype in-kernel)
    w1 : [Din, H]   weight of `first`
    w2 : [H, Dout]  weight of `second`
    compute_dtype : dtype fed to the MXU (e.g. jnp.bfloat16 on v6e/v7x);
                    accumulation is always f32.
    out_dtype     : output dtype (defaults to x.dtype; bf16 halves the output
                    HBM write on a memory-bound kernel).
    returns [N, Dout]
    """
    N, Din = x.shape
    Din2, H = w1.shape
    H2, Dout = w2.shape
    assert Din == Din2 and H == H2

    if compute_dtype is None:
        compute_dtype = x.dtype
    if out_dtype is None:
        out_dtype = x.dtype

    # Fold the e3nn fan-in normalization into the (grid-invariant) weights once.
    s1 = 1.0 / math.sqrt(Din)
    s2 = 1.0 / math.sqrt(H)
    w1s = (w1.astype(jnp.float32) * s1).astype(compute_dtype)
    w2s = (w2.astype(jnp.float32) * s2).astype(compute_dtype)

    # Sublane alignment: bf16 packs 2 rows per sublane -> align to 16.
    align = 16 if jnp.dtype(compute_dtype).itemsize == 2 else 8
    if tile_m is None:
        tile_m = _auto_tile_m(N, align, _target_steps())
    else:
        tile_m = max(align, min(_round_up(tile_m, align), _round_up(N, align)))

    # Ragged grid: no wrapper-side padding or output slicing.  OOB rows of the
    # last block are undefined on read and dropped on write (safe: per-row map).
    grid = (pl.cdiv(N, tile_m),)

    out = pl.pallas_call(
        _compose_kernel,
        out_shape=jax.ShapeDtypeStruct((N, Dout), out_dtype),
        grid_spec=pltpu.PrefetchScalarGridSpec(
            num_scalar_prefetch=0,
            grid=grid,
            in_specs=[
                pl.BlockSpec((tile_m, Din), lambda i: (i, 0)),  # node tile
                pl.BlockSpec((Din, H), lambda i: (0, 0)),       # W1 resident
                pl.BlockSpec((H, Dout), lambda i: (0, 0)),      # W2 resident
            ],
            out_specs=pl.BlockSpec((tile_m, Dout), lambda i: (i, 0)),
        ),
        compiler_params=pltpu.CompilerParams(
            dimension_semantics=("parallel",),  # node tiles shard across TCs (v7x)
        ),
    )(x, w1s, w2s)

    return out


if __name__ == "__main__":
    # Small NequIP-like node-feature MLP block; N is deliberately NOT a
    # multiple of tile_m to exercise the ragged last block.
    N, Din, H, Dout = 2000, 32, 64, 128

    key = jax.random.PRNGKey(0)
    kx, k1, k2 = jax.random.split(key, 3)

    x = jax.random.normal(kx, (N, Din), dtype=jnp.float32)
    # e3nn initializes weights ~ N(0,1) and applies 1/sqrt(fan_in) in forward.
    w1 = jax.random.normal(k1, (Din, H), dtype=jnp.float32)
    w2 = jax.random.normal(k2, (H, Dout), dtype=jnp.float32)

    # Pure-JAX reference for Compose(first, second) = second(first(x)).
    ref = ((x @ w1) * (1.0 / math.sqrt(Din))) @ w2 * (1.0 / math.sqrt(H))

    # f32 path (tight tolerance), auto tile selection / ragged grid.
    out = jax.block_until_ready(compose_forward(x, w1, w2))
    assert out.shape == (N, Dout)
    assert jnp.allclose(out, ref, atol=1e-4, rtol=1e-4)

    # bf16 MXU path (v6e/v7x): x cast in-kernel, h kept f32, f32 accumulation.
    out_bf16 = jax.block_until_ready(
        compose_forward(x, w1, w2, compute_dtype=jnp.bfloat16)
    )
    assert out_bf16.shape == (N, Dout)
    assert jnp.allclose(out_bf16, ref, atol=5e-2, rtol=5e-2)

    # bf16 output path (halves the dominant HBM write stream).
    out_bf16_o = jax.block_until_ready(
        compose_forward(x, w1, w2, compute_dtype=jnp.bfloat16,
                        out_dtype=jnp.bfloat16)
    )
    assert out_bf16_o.shape == (N, Dout)
    assert out_bf16_o.dtype == jnp.bfloat16
    assert jnp.allclose(out_bf16_o.astype(jnp.float32), ref, atol=6e-2, rtol=6e-2)

    # Explicit tile_m override still works (exercises clamping path).
    out_t = jax.block_until_ready(compose_forward(x, w1, w2, tile_m=512))
    assert jnp.allclose(out_t, ref, atol=1e-4, rtol=1e-4)

    print("KERNEL_OK")
</pallas_src>

<mosaic_0001>
module attributes {stable_mosaic.version = 11 : i64} {
  func.func @_compose_kernel(%arg0: i32, %arg1: memref<1000x32xf32, #tpu.memory_space<vmem>>, %arg2: memref<32x64xf32, #tpu.memory_space<vmem>>, %arg3: memref<64x128xf32, #tpu.memory_space<vmem>>, %arg4: memref<1000x128xf32, #tpu.memory_space<vmem>>) attributes {dimension_semantics = [#tpu.dimension_semantics<parallel>], iteration_bounds = array<i64: 2>, scalar_prefetch = 0 : i64, scratch_operands = 0 : i64, tpu.core_type = #tpu.core_type<tc>, window_params = [{transform_indices = @transform_0, window_bounds = array<i64: 1000, 32>}, {pipeline_mode = #tpu.pipeline_mode<synchronous>, transform_indices = @transform_1, window_bounds = array<i64: 32, 64>}, {pipeline_mode = #tpu.pipeline_mode<synchronous>, transform_indices = @transform_2, window_bounds = array<i64: 64, 128>}, {transform_indices = @transform_3, window_bounds = array<i64: 1000, 128>}]} {
    %c0 = arith.constant 0 : index
    %c0_0 = arith.constant 0 : index
    %0 = vector.load %arg1[%c0, %c0_0] : memref<1000x32xf32, #tpu.memory_space<vmem>>, vector<1000x32xf32>
    %c0_1 = arith.constant 0 : index
    %c0_2 = arith.constant 0 : index
    %1 = vector.load %arg2[%c0_1, %c0_2] : memref<32x64xf32, #tpu.memory_space<vmem>>, vector<32x64xf32>
    %cst = arith.constant dense<0.000000e+00> : vector<1000x64xf32>
    %2 = tpu.matmul %0, %1, %cst {dimension_numbers = #tpu.dot_dimension_numbers<[1], [0], [0], [1], [0, 0, 1, 1], [], []>} : vector<1000x32xf32>, vector<32x64xf32>, vector<1000x64xf32> -> vector<1000x64xf32>
    %c0_3 = arith.constant 0 : index
    %c0_4 = arith.constant 0 : index
    %3 = vector.load %arg3[%c0_3, %c0_4] : memref<64x128xf32, #tpu.memory_space<vmem>>, vector<64x128xf32>
    %cst_5 = arith.constant dense<0.000000e+00> : vector<1000x128xf32>
    %4 = tpu.matmul %2, %3, %cst_5 {dimension_numbers = #tpu.dot_dimension_numbers<[1], [0], [0], [1], [0, 0, 1, 1], [], []>} : vector<1000x64xf32>, vector<64x128xf32>, vector<1000x128xf32> -> vector<1000x128xf32>
    %c0_6 = arith.constant 0 : index
    %c0_7 = arith.constant 0 : index
    %5 = vector.load %arg4[%c0_6, %c0_7] : memref<1000x128xf32, #tpu.memory_space<vmem>>, vector<1000x128xf32>
    tpu.vector_store %arg4[%c0_6, %c0_7], %4 {strides = array<i32>} : memref<1000x128xf32, #tpu.memory_space<vmem>>, vector<1000x128xf32>,
    return
  }
  func.func @transform_0(%arg0: i32) -> (i32, i32) {
    %c0_i32 = arith.constant 0 : i32
    %c0_i32_0 = arith.constant 0 : i32
    return %arg0, %c0_i32 : i32, i32
  }
  func.func @transform_1(%arg0: i32) -> (i32, i32) {
    %c0_i32 = arith.constant 0 : i32
    %c0_i32_0 = arith.constant 0 : i32
    %c0_i32_1 = arith.constant 0 : i32
    return %c0_i32, %c0_i32_0 : i32, i32
  }
  func.func @transform_2(%arg0: i32) -> (i32, i32) {
    %c0_i32 = arith.constant 0 : i32
    %c0_i32_0 = arith.constant 0 : i32
    %c0_i32_1 = arith.constant 0 : i32
    return %c0_i32, %c0_i32_0 : i32, i32
  }
  func.func @transform_3(%arg0: i32) -> (i32, i32) {
    %c0_i32 = arith.constant 0 : i32
    %c0_i32_0 = arith.constant 0 : i32
    return %arg0, %c0_i32 : i32, i32
  }
}

</mosaic_0001>

<llo_original>
// kernel: tpu_custom_call.1
$region0: #{tpu_custom_call.1}
  #allocation0 [shape = 'u32[]', space=smem, size = 0x4, offset = 0x4, fixed_abs, tag = 'smem constant byte address 0x4 - core index']
  #allocation1 [shape = 'u32[144,128]{1,0:T(1,128)}', space=vmem, size = 0x12000, scoped, tag = 'internal scratch']
  %s0 = inlined_call_operand.vmem [shape: f32[2000,32], index: 0, kind: input, shape index: {}]
  %s1 = inlined_call_operand.vmem [shape: f32[32,64], index: 1, kind: input, shape index: {}]
  %s2 = inlined_call_operand.vmem [shape: f32[64,128], index: 2, kind: input, shape index: {}]
  %s3 = inlined_call_operand.hbm [shape: f32[2000,128], index: 3, kind: output, shape index: {}]
  %s4 = sld [smem:[#allocation0]]
  $region45: #{tpu_custom_call.1} parent=0
    _
  %s6 = ssub.s32 1, %s4
  %s7 = scalar_select 0, %s6, %s4
  $region1: #{tpu_custom_call.1} parent=0
    #allocation2 [shape = 'u8[1024000]{0}', space=vmem, size = 0xfa000, scoped, tag = 'output window, operand 0']
    #allocation3 [shape = 's32[2]{0}', space=sflag, size = 0x8, scoped, tag = 'scoped memory for tpu_custom_call.1']
    %8 = vsyncpa [#allocation3], 0
    %s9 = scalar_lea.sflag [#allocation3], 1
    %10 = vsyncpa %s9, 0
    loop: start=0, step=1, limit=4
    $region2: #{tpu_custom_call.1} parent=1 // loop_pre_header
      _
    $region3: #{tpu_custom_call.1} parent=1 // loop_header
      %s12 = sphi 0, %s16
      %p13 = scmp.ge.s32.totalorder %s12, 4
      %s22 = sphi 0, %s24
      %s25 = sphi 0, %s22
      %s26 = sphi 0, %s25
      %s42 = sphi 0, %s26
      %s46 = sphi 0, %s46
      %s48 = sphi 0, %s46
      %s49 = sphi 0, %s48
      %s63 = sphi 0, %s49
      %s67 = sphi 0, %s67
      %s69 = sphi 0, %s67
      %s70 = sphi 0, %s69
      %s84 = sphi 0, %s70
      %s90 = sphi 0, %s92
      %s93 = sphi 0, %s90
      %s94 = sphi 0, %s93
      %s110 = sphi 0, %s94
    $region4: #{tpu_custom_call.1} parent=1 // loop_header_branch
      %15 = sbr.rel (%p13) target = $region8
    $region5: #{tpu_custom_call.1} parent=1 // loop_body
      %s17 = ssub.s32 %s12, 1
      %s18 = ssub.s32 %s12, 2
      %s19 = sadd.s32 %s12, 1
      %s20 = ssub.s32 %s12, %s19
      %p21 = scmp.eq.s32.totalorder %s20, 0
      %s23 = sadd.s32 %s22, 1
      %s24 = scalar_select %p21, %s22, %s23
      %p27 = pneg %p21
      %p28 = scmp.eq.s32.totalorder %s12, 1
      %p29 = por %p27, %p28
      %p30 = scmp.ne.s32.totalorder %s22, %s25
      %p31 = scmp.eq.s32.totalorder %s12, 0
      %p32 = por %p30, %p31
      %p33 = scmp.ne.s32.totalorder %s22, %s25
      %p34 = scmp.eq.s32.totalorder %s17, 1
      %p35 = por %p33, %p34
      %p36 = scmp.ne.s32.totalorder %s25, %s26
      %p37 = scmp.eq.s32.totalorder %s17, 0
      %p38 = por %p36, %p37
      %p39 = scmp.ne.s32.totalorder %s25, %s26
      %p40 = scmp.eq.s32.totalorder %s18, 1
      %p41 = por %p39, %p40
      %p43 = scmp.ne.s32.totalorder %s26, %s42
      %p44 = scmp.eq.s32.totalorder %s18, 0
      %p45 = por %p43, %p44
      %s47 = sadd.s32 %s46, 1
      %p50 = scmp.eq.s32.totalorder %s12, 1
      %p51 = scmp.ne.s32.totalorder %s46, %s48
      %p52 = scmp.eq.s32.totalorder %s12, 0
      %p53 = por %p51, %p52
      %p54 = scmp.ne.s32.totalorder %s46, %s48
      %p55 = scmp.eq.s32.totalorder %s17, 1
      %p56 = por %p54, %p55
      %p57 = scmp.ne.s32.totalorder %s48, %s49
      %p58 = scmp.eq.s32.totalorder %s17, 0
      %p59 = por %p57, %p58
      %p60 = scmp.ne.s32.totalorder %s48, %s49
      %p61 = scmp.eq.s32.totalorder %s18, 1
      %p62 = por %p60, %p61
      %p64 = scmp.ne.s32.totalorder %s49, %s63
      %p65 = scmp.eq.s32.totalorder %s18, 0
      %p66 = por %p64, %p65
      %s68 = sadd.s32 %s67, 1
      %p71 = scmp.eq.s32.totalorder %s12, 1
      %p72 = scmp.ne.s32.totalorder %s67, %s69
      %p73 = scmp.eq.s32.totalorder %s12, 0
      %p74 = por %p72, %p73
      %p75 = scmp.ne.s32.totalorder %s67, %s69
      %p76 = scmp.eq.s32.totalorder %s17, 1
      %p77 = por %p75, %p76
      %p78 = scmp.ne.s32.totalorder %s69, %s70
      %p79 = scmp.eq.s32.totalorder %s17, 0
      %p80 = por %p78, %p79
      %p81 = scmp.ne.s32.totalorder %s69, %s70
      %p82 = scmp.eq.s32.totalorder %s18, 1
      %p83 = por %p81, %p82
      %p85 = scmp.ne.s32.totalorder %s70, %s84
      %p86 = scmp.eq.s32.totalorder %s18, 0
      %p87 = por %p85, %p86
      %s88 = ssub.s32 %s12, %s19
      %p89 = scmp.eq.s32.totalorder %s88, 0
      %s91 = sadd.s32 %s90, 1
      %s92 = scalar_select %p89, %s90, %s91
      %p95 = pneg %p89
      %p96 = scmp.eq.s32.totalorder %s12, 1
      %p97 = por %p95, %p96
      %p98 = scmp.ne.s32.totalorder %s90, %s93
      %p99 = scmp.eq.s32.totalorder %s12, 0
      %p100 = por %p98, %p99
      %p101 = scmp.ne.s32.totalorder %s90, %s93
      %p102 = scmp.eq.s32.totalorder %s17, 1
      %p103 = por %p101, %p102
      %p104 = scmp.ne.s32.totalorder %s93, %s94
      %p105 = scmp.eq.s32.totalorder %s17, 0
      %p106 = por %p104, %p105
      %p107 = scmp.ne.s32.totalorder %s93, %s94
      %p108 = scmp.eq.s32.totalorder %s18, 1
      %p109 = por %p107, %p108
      %p111 = scmp.ne.s32.totalorder %s94, %s110
      %p112 = scmp.eq.s32.totalorder %s18, 0
      %p113 = por %p111, %p112
      %p114 = scmp.le.s32.totalorder 1, %s12
      %p115 = scmp.lt.s32.totalorder %s12, 3
      %p116 = pnand %p114, %p115
      %p117 = pneg %p116
      // Predicated region
      $region9: #{tpu_custom_call.1} parent=5 // pred_check
        _
      $region10: #{tpu_custom_call.1} parent=5 // pred_check_branch
        %119 = sbr.rel (%p116) target = $region12
      $region11: #{tpu_custom_call.1} parent=5 // pred_region
        %s120 = ssub.s32 %s12, 1
        // Predicated region
        $region13: #{tpu_custom_call.1} parent=11 // pred_check
          %p121 = pneg %p59
        $region14: #{tpu_custom_call.1} parent=11 // pred_check_branch
          %123 = sbr.rel (%p121) target = $region16
        $region15: #{tpu_custom_call.1} parent=11 // pred_region
          _
        $region16: #{tpu_custom_call.1} parent=11 // pred_fallthru
          _
        // Predicated region
        $region17: #{tpu_custom_call.1} parent=11 // pred_check
          %p124 = pneg %p80
        $region18: #{tpu_custom_call.1} parent=11 // pred_check_branch
          %126 = sbr.rel (%p124) target = $region20
        $region19: #{tpu_custom_call.1} parent=11 // pred_region
          _
        $region20: #{tpu_custom_call.1} parent=11 // pred_fallthru
          _
      $region12: #{tpu_custom_call.1} parent=5 // pred_fallthru
        _
      %p127 = scmp.lt.s32.totalorder %s12, 2
      // Predicated region
      $region21: #{tpu_custom_call.1} parent=5 // pred_check
        %p128 = pneg %p127
      $region22: #{tpu_custom_call.1} parent=5 // pred_check_branch
        %130 = sbr.rel (%p128) target = $region24
      $region23: #{tpu_custom_call.1} parent=5 // pred_region
        // Predicated region
        $region25: #{tpu_custom_call.1} parent=23 // pred_check
          %p131 = pneg %p32
        $region26: #{tpu_custom_call.1} parent=23 // pred_check_branch
          %133 = sbr.rel (%p131) target = $region28
        $region27: #{tpu_custom_call.1} parent=23 // pred_region
          %s134 = smul.u32 125, %s12
          %p135 = scmp.lt.s32.totalorder %s134, 249
          %s136 = scalar_select %p135, %s134, 249
          %s137 = smul.addr %s136, 8
          %s138 = scalar_lea.vmem %s0, %s137
          %s139 = smul.u32 125, %s12
        $region28: #{tpu_custom_call.1} parent=23 // pred_fallthru
          _
      $region24: #{tpu_custom_call.1} parent=5 // pred_fallthru
        _
      %p140 = scmp.le.s32.totalorder 1, %s12
      %p141 = scmp.lt.s32.totalorder %s12, 3
      %p142 = pnand %p140, %p141
      %p143 = pneg %p142
      // Predicated region
      $region29: #{tpu_custom_call.1} parent=5 // pred_check
        _
      $region30: #{tpu_custom_call.1} parent=5 // pred_check_branch
        %145 = sbr.rel (%p142) target = $region32
      $region31: #{tpu_custom_call.1} parent=5 // pred_region
        %s146 = ssub.s32 %s12, 1
        %s147 = smul.u32 125, %s17
        %p148 = scmp.lt.s32.totalorder %s147, 249
        %s149 = scalar_select %p148, %s147, 249
        %s150 = smul.addr %s149, 8
        %s151 = scalar_lea.vmem %s0, %s150
        %p152 = pneg %p38
        %p153 = pneg %p35
        %p154 = pneg %p59
        %p155 = pneg %p56
        %p156 = pneg %p80
        %p157 = pneg %p77
        %p158 = pneg %p106
        %p159 = pneg %p103
        %s160 = sand.u32 %s93, 1
        %s161 = scalar_lea.sflag [#allocation3], %s160
        %s162 = sand.u32 %s93, 1
        %s163 = smul.addr %s162, 1000
        %s164 = scalar_lea.vmem [#allocation2], %s163
        %s165 = smul.u32 125, %s17
        %p166 = scmp.lt.s32.totalorder %s165, 249
        %s167 = scalar_select %p166, %s165, 249
        %s168 = smul.addr %s167, 8
        %s169 = scalar_lea.vmem %s0, %s168
        %s170 = smul.u32 125, %s17
        %s171 = smul.u32 125, %s17
        %v172 = vld [vmem:[%s169] sm:$0xff]
        %v173 = vld [vmem:[%s169 + $0x8] sm:$0xff]
        %v174 = vld [vmem:[%s169 + $0x10] sm:$0xff]
        %v175 = vld [vmem:[%s169 + $0x18] sm:$0xff]
        %v176 = vld [vmem:[%s169 + $0x20] sm:$0xff]
        %v177 = vld [vmem:[%s169 + $0x28] sm:$0xff]
        %v178 = vld [vmem:[%s169 + $0x30] sm:$0xff]
        %v179 = vld [vmem:[%s169 + $0x38] sm:$0xff]
        %v180 = vld [vmem:[%s169 + $0x40] sm:$0xff]
        %v181 = vld [vmem:[%s169 + $0x48] sm:$0xff]
        %v182 = vld [vmem:[%s169 + $0x50] sm:$0xff]
        %v183 = vld [vmem:[%s169 + $0x58] sm:$0xff]
        %v184 = vld [vmem:[%s169 + $0x60] sm:$0xff]
        %v185 = vld [vmem:[%s169 + $0x68] sm:$0xff]
        %v186 = vld [vmem:[%s169 + $0x70] sm:$0xff]
        %v187 = vld [vmem:[%s169 + $0x78] sm:$0xff]
        %v188 = vld [vmem:[%s169 + $0x80] sm:$0xff]
        %v189 = vld [vmem:[%s169 + $0x88] sm:$0xff]
        %v190 = vld [vmem:[%s169 + $0x90] sm:$0xff]
        %v191 = vld [vmem:[%s169 + $0x98] sm:$0xff]
        %v192 = vld [vmem:[%s169 + $0xa0] sm:$0xff]
        %v193 = vld [vmem:[%s169 + $0xa8] sm:$0xff]
        %v194 = vld [vmem:[%s169 + $0xb0] sm:$0xff]
        %v195 = vld [vmem:[%s169 + $0xb8] sm:$0xff]
        %v196 = vld [vmem:[%s169 + $0xc0] sm:$0xff]
        %v197 = vld [vmem:[%s169 + $0xc8] sm:$0xff]
        %v198 = vld [vmem:[%s169 + $0xd0] sm:$0xff]
        %v199 = vld [vmem:[%s169 + $0xd8] sm:$0xff]
        %v200 = vld [vmem:[%s169 + $0xe0] sm:$0xff]
        %v201 = vld [vmem:[%s169 + $0xe8] sm:$0xff]
        %v202 = vld [vmem:[%s169 + $0xf0] sm:$0xff]
        %v203 = vld [vmem:[%s169 + $0xf8] sm:$0xff]
        %v204 = vld [vmem:[%s169 + $0x100] sm:$0xff]
        %v205 = vld [vmem:[%s169 + $0x108] sm:$0xff]
        %v206 = vld [vmem:[%s169 + $0x110] sm:$0xff]
        %v207 = vld [vmem:[%s169 + $0x118] sm:$0xff]
        %v208 = vld [vmem:[%s169 + $0x120] sm:$0xff]
        %v209 = vld [vmem:[%s169 + $0x128] sm:$0xff]
        %v210 = vld [vmem:[%s169 + $0x130] sm:$0xff]
        %v211 = vld [vmem:[%s169 + $0x138] sm:$0xff]
        %v212 = vld [vmem:[%s169 + $0x140] sm:$0xff]
        %v213 = vld [vmem:[%s169 + $0x148] sm:$0xff]
        %v214 = vld [vmem:[%s169 + $0x150] sm:$0xff]
        %v215 = vld [vmem:[%s169 + $0x158] sm:$0xff]
        %v216 = vld [vmem:[%s169 + $0x160] sm:$0xff]
        %v217 = vld [vmem:[%s169 + $0x168] sm:$0xff]
        %v218 = vld [vmem:[%s169 + $0x170] sm:$0xff]
        %v219 = vld [vmem:[%s169 + $0x178] sm:$0xff]
        %v220 = vld [vmem:[%s169 + $0x180] sm:$0xff]
        %v221 = vld [vmem:[%s169 + $0x188] sm:$0xff]
        %v222 = vld [vmem:[%s169 + $0x190] sm:$0xff]
        %v223 = vld [vmem:[%s169 + $0x198] sm:$0xff]
        %v224 = vld [vmem:[%s169 + $0x1a0] sm:$0xff]
        %v225 = vld [vmem:[%s169 + $0x1a8] sm:$0xff]
        %v226 = vld [vmem:[%s169 + $0x1b0] sm:$0xff]
        %v227 = vld [vmem:[%s169 + $0x1b8] sm:$0xff]
        %v228 = vld [vmem:[%s169 + $0x1c0] sm:$0xff]
        %v229 = vld [vmem:[%s169 + $0x1c8] sm:$0xff]
        %v230 = vld [vmem:[%s169 + $0x1d0] sm:$0xff]
        %v231 = vld [vmem:[%s169 + $0x1d8] sm:$0xff]
        %v232 = vld [vmem:[%s169 + $0x1e0] sm:$0xff]
        %v233 = vld [vmem:[%s169 + $0x1e8] sm:$0xff]
        %v234 = vld [vmem:[%s169 + $0x1f0] sm:$0xff]
        %v235 = vld [vmem:[%s169 + $0x1f8] sm:$0xff]
        %v236 = vld [vmem:[%s169 + $0x200] sm:$0xff]
        %v237 = vld [vmem:[%s169 + $0x208] sm:$0xff]
        %v238 = vld [vmem:[%s169 + $0x210] sm:$0xff]
        %v239 = vld [vmem:[%s169 + $0x218] sm:$0xff]
        %v240 = vld [vmem:[%s169 + $0x220] sm:$0xff]
        %v241 = vld [vmem:[%s169 + $0x228] sm:$0xff]
        %v242 = vld [vmem:[%s169 + $0x230] sm:$0xff]
        %v243 = vld [vmem:[%s169 + $0x238] sm:$0xff]
        %v244 = vld [vmem:[%s169 + $0x240] sm:$0xff]
        %v245 = vld [vmem:[%s169 + $0x248] sm:$0xff]
        %v246 = vld [vmem:[%s169 + $0x250] sm:$0xff]
        %v247 = vld [vmem:[%s169 + $0x258] sm:$0xff]
        %v248 = vld [vmem:[%s169 + $0x260] sm:$0xff]
        %v249 = vld [vmem:[%s169 + $0x268] sm:$0xff]
        %v250 = vld [vmem:[%s169 + $0x270] sm:$0xff]
        %v251 = vld [vmem:[%s169 + $0x278] sm:$0xff]
        %v252 = vld [vmem:[%s169 + $0x280] sm:$0xff]
        %v253 = vld [vmem:[%s169 + $0x288] sm:$0xff]
        %v254 = vld [vmem:[%s169 + $0x290] sm:$0xff]
        %v255 = vld [vmem:[%s169 + $0x298] sm:$0xff]
        %v256 = vld [vmem:[%s169 + $0x2a0] sm:$0xff]
        %v257 = vld [vmem:[%s169 + $0x2a8] sm:$0xff]
        %v258 = vld [vmem:[%s169 + $0x2b0] sm:$0xff]
        %v259 = vld [vmem:[%s169 + $0x2b8] sm:$0xff]
        %v260 = vld [vmem:[%s169 + $0x2c0] sm:$0xff]
        %v261 = vld [vmem:[%s169 + $0x2c8] sm:$0xff]
        %v262 = vld [vmem:[%s169 + $0x2d0] sm:$0xff]
        %v263 = vld [vmem:[%s169 + $0x2d8] sm:$0xff]
        %v264 = vld [vmem:[%s169 + $0x2e0] sm:$0xff]
        %v265 = vld [vmem:[%s169 + $0x2e8] sm:$0xff]
        %v266 = vld [vmem:[%s169 + $0x2f0] sm:$0xff]
        %v267 = vld [vmem:[%s169 + $0x2f8] sm:$0xff]
        %v268 = vld [vmem:[%s169 + $0x300] sm:$0xff]
        %v269 = vld [vmem:[%s169 + $0x308] sm:$0xff]
        %v270 = vld [vmem:[%s169 + $0x310] sm:$0xff]
        %v271 = vld [vmem:[%s169 + $0x318] sm:$0xff]
        %v272 = vld [vmem:[%s169 + $0x320] sm:$0xff]
        %v273 = vld [vmem:[%s169 + $0x328] sm:$0xff]
        %v274 = vld [vmem:[%s169 + $0x330] sm:$0xff]
        %v275 = vld [vmem:[%s169 + $0x338] sm:$0xff]
        %v276 = vld [vmem:[%s169 + $0x340] sm:$0xff]
        %v277 = vld [vmem:[%s169 + $0x348] sm:$0xff]
        %v278 = vld [vmem:[%s169 + $0x350] sm:$0xff]
        %v279 = vld [vmem:[%s169 + $0x358] sm:$0xff]
        %v280 = vld [vmem:[%s169 + $0x360] sm:$0xff]
        %v281 = vld [vmem:[%s169 + $0x368] sm:$0xff]
        %v282 = vld [vmem:[%s169 + $0x370] sm:$0xff]
        %v283 = vld [vmem:[%s169 + $0x378] sm:$0xff]
        %v284 = vld [vmem:[%s169 + $0x380] sm:$0xff]
        %v285 = vld [vmem:[%s169 + $0x388] sm:$0xff]
        %v286 = vld [vmem:[%s169 + $0x390] sm:$0xff]
        %v287 = vld [vmem:[%s169 + $0x398] sm:$0xff]
        %v288 = vld [vmem:[%s169 + $0x3a0] sm:$0xff]
        %v289 = vld [vmem:[%s169 + $0x3a8] sm:$0xff]
        %v290 = vld [vmem:[%s169 + $0x3b0] sm:$0xff]
        %v291 = vld [vmem:[%s169 + $0x3b8] sm:$0xff]
        %v292 = vld [vmem:[%s169 + $0x3c0] sm:$0xff]
        %v293 = vld [vmem:[%s169 + $0x3c8] sm:$0xff]
        %v294 = vld [vmem:[%s169 + $0x3d0] sm:$0xff]
        %v295 = vld [vmem:[%s169 + $0x3d8] sm:$0xff]
        %v296 = vld [vmem:[%s169 + $0x3e0] sm:$0xff]
        %v297 = vld [vmem:[%s1] sm:$0xff]
        %v298 = vld [vmem:[%s1 + $0x8] sm:$0xff]
        %v299 = vld [vmem:[%s1 + $0x10] sm:$0xff]
        %v300 = vld [vmem:[%s1 + $0x18] sm:$0xff]
        %vm301 = vcmask 261120
        %v303 = vsel %vm301, %v172, 0
        %v306 = vsel %vm301, %v173, 0
        %v309 = vsel %vm301, %v174, 0
        %v312 = vsel %vm301, %v175, 0
        %v315 = vsel %vm301, %v176, 0
        %v318 = vsel %vm301, %v177, 0
        %v321 = vsel %vm301, %v178, 0
        %v324 = vsel %vm301, %v179, 0
        %v327 = vsel %vm301, %v180, 0
        %v330 = vsel %vm301, %v181, 0
        %v333 = vsel %vm301, %v182, 0
        %v336 = vsel %vm301, %v183, 0
        %v339 = vsel %vm301, %v184, 0
        %v342 = vsel %vm301, %v185, 0
        %v345 = vsel %vm301, %v186, 0
        %v348 = vsel %vm301, %v187, 0
        %v351 = vsel %vm301, %v188, 0
        %v354 = vsel %vm301, %v189, 0
        %v357 = vsel %vm301, %v190, 0
        %v360 = vsel %vm301, %v191, 0
        %v363 = vsel %vm301, %v192, 0
        %v366 = vsel %vm301, %v193, 0
        %v369 = vsel %vm301, %v194, 0
        %v372 = vsel %vm301, %v195, 0
        %v375 = vsel %vm301, %v196, 0
        %v378 = vsel %vm301, %v197, 0
        %v381 = vsel %vm301, %v198, 0
        %v384 = vsel %vm301, %v199, 0
        %v387 = vsel %vm301, %v200, 0
        %v390 = vsel %vm301, %v201, 0
        %v393 = vsel %vm301, %v202, 0
        %v396 = vsel %vm301, %v203, 0
        %v399 = vsel %vm301, %v204, 0
        %v402 = vsel %vm301, %v205, 0
        %v405 = vsel %vm301, %v206, 0
        %v408 = vsel %vm301, %v207, 0
        %v411 = vsel %vm301, %v208, 0
        %v414 = vsel %vm301, %v209, 0
        %v417 = vsel %vm301, %v210, 0
        %v420 = vsel %vm301, %v211, 0
        %v423 = vsel %vm301, %v212, 0
        %v426 = vsel %vm301, %v213, 0
        %v429 = vsel %vm301, %v214, 0
        %v432 = vsel %vm301, %v215, 0
        %v435 = vsel %vm301, %v216, 0
        %v438 = vsel %vm301, %v217, 0
        %v441 = vsel %vm301, %v218, 0
        %v444 = vsel %vm301, %v219, 0
        %v447 = vsel %vm301, %v220, 0
        %v450 = vsel %vm301, %v221, 0
        %v453 = vsel %vm301, %v222, 0
        %v456 = vsel %vm301, %v223, 0
        %v459 = vsel %vm301, %v224, 0
        %v462 = vsel %vm301, %v225, 0
        %v465 = vsel %vm301, %v226, 0
        %v468 = vsel %vm301, %v227, 0
        %v471 = vsel %vm301, %v228, 0
        %v474 = vsel %vm301, %v229, 0
        %v477 = vsel %vm301, %v230, 0
        %v480 = vsel %vm301, %v231, 0
        %v483 = vsel %vm301, %v232, 0
        %v486 = vsel %vm301, %v233, 0
        %v489 = vsel %vm301, %v234, 0
        %v492 = vsel %vm301, %v235, 0
        %v495 = vsel %vm301, %v236, 0
        %v498 = vsel %vm301, %v237, 0
        %v501 = vsel %vm301, %v238, 0
        %v504 = vsel %vm301, %v239, 0
        %v507 = vsel %vm301, %v240, 0
        %v510 = vsel %vm301, %v241, 0
        %v513 = vsel %vm301, %v242, 0
        %v516 = vsel %vm301, %v243, 0
        %v519 = vsel %vm301, %v244, 0
        %v522 = vsel %vm301, %v245, 0
        %v525 = vsel %vm301, %v246, 0
        %v528 = vsel %vm301, %v247, 0
        %v531 = vsel %vm301, %v248, 0
        %v534 = vsel %vm301, %v249, 0
        %v537 = vsel %vm301, %v250, 0
        %v540 = vsel %vm301, %v251, 0
        %v543 = vsel %vm301, %v252, 0
        %v546 = vsel %vm301, %v253, 0
        %v549 = vsel %vm301, %v254, 0
        %v552 = vsel %vm301, %v255, 0
        %v555 = vsel %vm301, %v256, 0
        %v558 = vsel %vm301, %v257, 0
        %v561 = vsel %vm301, %v258, 0
        %v564 = vsel %vm301, %v259, 0
        %v567 = vsel %vm301, %v260, 0
        %v570 = vsel %vm301, %v261, 0
        %v573 = vsel %vm301, %v262, 0
        %v576 = vsel %vm301, %v263, 0
        %v579 = vsel %vm301, %v264, 0
        %v582 = vsel %vm301, %v265, 0
        %v585 = vsel %vm301, %v266, 0
        %v588 = vsel %vm301, %v267, 0
        %v591 = vsel %vm301, %v268, 0
        %v594 = vsel %vm301, %v269, 0
        %v597 = vsel %vm301, %v270, 0
        %v600 = vsel %vm301, %v271, 0
        %v603 = vsel %vm301, %v272, 0
        %v606 = vsel %vm301, %v273, 0
        %v609 = vsel %vm301, %v274, 0
        %v612 = vsel %vm301, %v275, 0
        %v615 = vsel %vm301, %v276, 0
        %v618 = vsel %vm301, %v277, 0
        %v621 = vsel %vm301, %v278, 0
        %v624 = vsel %vm301, %v279, 0
        %v627 = vsel %vm301, %v280, 0
        %v630 = vsel %vm301, %v281, 0
        %v633 = vsel %vm301, %v282, 0
        %v636 = vsel %vm301, %v283, 0
        %v639 = vsel %vm301, %v284, 0
        %v642 = vsel %vm301, %v285, 0
        %v645 = vsel %vm301, %v286, 0
        %v648 = vsel %vm301, %v287, 0
        %v651 = vsel %vm301, %v288, 0
        %v654 = vsel %vm301, %v289, 0
        %v657 = vsel %vm301, %v290, 0
        %v660 = vsel %vm301, %v291, 0
        %v663 = vsel %vm301, %v292, 0
        %v666 = vsel %vm301, %v293, 0
        %v669 = vsel %vm301, %v294, 0
        %v672 = vsel %vm301, %v295, 0
        %v675 = vsel %vm301, %v296, 0
        %677 = vmatprep.subr.mxu0 0.0
        %678 = vmatpush1.msra.mxu0 0.0
        %679 = vmatprep.subr.mxu0 0.0
        %680 = vmatpush1.msra.mxu0 0.0
        %681 = vmatprep.subr.mxu0 0.0
        %682 = vmatpush1.msra.mxu0 0.0
        %683 = vmatprep.subr.mxu0 0.0
        %684 = vmatpush1.msra.mxu0 0.0
        %685 = vmatprep.subr.mxu0 0.0
        %686 = vmatpush1.msra.mxu0 0.0
        %687 = vmatprep.subr.mxu0 0.0
        %688 = vmatpush1.msra.mxu0 0.0
        %689 = vmatprep.subr.mxu0 0.0
        %690 = vmatpush1.msra.mxu0 0.0
        %691 = vmatprep.subr.mxu0 0.0
        %692 = vmatpush1.msra.mxu0 0.0
        %693 = vmatprep.subr.mxu0 0.0
        %694 = vmatpush1.msra.mxu0 0.0
        %695 = vmatprep.subr.mxu0 0.0
        %696 = vmatpush1.msra.mxu0 0.0
        %697 = vmatprep.subr.mxu0 0.0
        %698 = vmatpush1.msra.mxu0 0.0
        %699 = vmatprep.subr.mxu0 0.0
        %700 = vmatpush1.msra.mxu0 0.0
        %701 = vmatprep.subr.mxu0 0.0
        %702 = vmatpush1.msra.mxu0 %v300
        %703 = vmatprep.subr.mxu0 0.0
        %704 = vmatpush1.msra.mxu0 %v299
        %705 = vmatprep.subr.mxu0 0.0
        %706 = vmatpush1.msra.mxu0 %v298
        %707 = vmatprep.subr.mxu0 0.0
        %708 = vmatpush1.msra.mxu0 %v297
        %709 = vmatprep.subr.mxu0 0.0
        %710 = vmatpush2.msra.mxu0 0.0
        %711 = vmatprep.subr.mxu0 0.0
        %712 = vmatpush2.msra.mxu0 0.0
        %713 = vmatprep.subr.mxu0 0.0
        %714 = vmatpush2.msra.mxu0 0.0
        %715 = vmatprep.subr.mxu0 0.0
        %716 = vmatpush2.msra.mxu0 0.0
        %717 = vmatprep.subr.mxu0 0.0
        %718 = vmatpush2.msra.mxu0 0.0
        %719 = vmatprep.subr.mxu0 0.0
        %720 = vmatpush2.msra.mxu0 0.0
        %721 = vmatprep.subr.mxu0 0.0
        %722 = vmatpush2.msra.mxu0 0.0
        %723 = vmatprep.subr.mxu0 0.0
        %724 = vmatpush2.msra.mxu0 0.0
        %725 = vmatprep.subr.mxu0 0.0
        %726 = vmatpush2.msra.mxu0 0.0
        %727 = vmatprep.subr.mxu0 0.0
        %728 = vmatpush2.msra.mxu0 0.0
        %729 = vmatprep.subr.mxu0 0.0
        %730 = vmatpush2.msra.mxu0 0.0
        %731 = vmatprep.subr.mxu0 0.0
        %732 = vmatpush2.msra.mxu0 0.0
        %733 = vmatprep.subr.mxu0 0.0
        %734 = vmatpush2.msra.mxu0 0.0
        %735 = vmatprep.subr.mxu0 0.0
        %736 = vmatpush2.msra.mxu0 0.0
        %737 = vmatprep.subr.mxu0 0.0
        %738 = vmatpush2.msra.mxu0 0.0
        %739 = vmatprep.subr.mxu0 0.0
        %740 = vmatpush2.msra.mxu0 0.0
        %741 = vmatprep.mubr.f32.mxu0 0.0
        %742 = vmatmul.mubr.f32.gmra.mxu0 %v303
        %v743 = vpop.f32.mrf.mxu0
        %v744 = vadd.f32 0.0, %v743
        %v745 = vpop.f32.mrf.mxu0
        %746 = vmatprep.mubr.f32.mxu0 0.0
        %747 = vmatmul.mubr.f32.gmra.mxu0 %v306
        %v748 = vpop.f32.mrf.mxu0
        %v749 = vadd.f32 0.0, %v748
        %v750 = vpop.f32.mrf.mxu0
        %751 = vmatprep.mubr.f32.mxu0 0.0
        %752 = vmatmul.mubr.f32.gmra.mxu0 %v309
        %v753 = vpop.f32.mrf.mxu0
        %v754 = vadd.f32 0.0, %v753
        %v755 = vpop.f32.mrf.mxu0
        %756 = vmatprep.mubr.f32.mxu0 0.0
        %757 = vmatmul.mubr.f32.gmra.mxu0 %v312
        %v758 = vpop.f32.mrf.mxu0
        %v759 = vadd.f32 0.0, %v758
        %v760 = vpop.f32.mrf.mxu0
        %761 = vmatprep.mubr.f32.mxu0 0.0
        %762 = vmatmul.mubr.f32.gmra.mxu0 %v315
        %v763 = vpop.f32.mrf.mxu0
        %v764 = vadd.f32 0.0, %v763
        %v765 = vpop.f32.mrf.mxu0
        %766 = vmatprep.mubr.f32.mxu0 0.0
        %767 = vmatmul.mubr.f32.gmra.mxu0 %v318
        %v768 = vpop.f32.mrf.mxu0
        %v769 = vadd.f32 0.0, %v768
        %v770 = vpop.f32.mrf.mxu0
        %771 = vmatprep.mubr.f32.mxu0 0.0
        %772 = vmatmul.mubr.f32.gmra.mxu0 %v321
        %v773 = vpop.f32.mrf.mxu0
        %v774 = vadd.f32 0.0, %v773
        %v775 = vpop.f32.mrf.mxu0
        %776 = vmatprep.mubr.f32.mxu0 0.0
        %777 = vmatmul.mubr.f32.gmra.mxu0 %v324
        %v778 = vpop.f32.mrf.mxu0
        %v779 = vadd.f32 0.0, %v778
        %v780 = vpop.f32.mrf.mxu0
        %781 = vmatprep.mubr.f32.mxu0 0.0
        %782 = vmatmul.mubr.f32.gmra.mxu0 %v327
        %v783 = vpop.f32.mrf.mxu0
        %v784 = vadd.f32 0.0, %v783
        %v785 = vpop.f32.mrf.mxu0
        %786 = vmatprep.mubr.f32.mxu0 0.0
        %787 = vmatmul.mubr.f32.gmra.mxu0 %v330
        %v788 = vpop.f32.mrf.mxu0
        %v789 = vadd.f32 0.0, %v788
        %v790 = vpop.f32.mrf.mxu0
        %791 = vmatprep.mubr.f32.mxu0 0.0
        %792 = vmatmul.mubr.f32.gmra.mxu0 %v333
        %v793 = vpop.f32.mrf.mxu0
        %v794 = vadd.f32 0.0, %v793
        %v795 = vpop.f32.mrf.mxu0
        %796 = vmatprep.mubr.f32.mxu0 0.0
        %797 = vmatmul.mubr.f32.gmra.mxu0 %v336
        %v798 = vpop.f32.mrf.mxu0
        %v799 = vadd.f32 0.0, %v798
        %v800 = vpop.f32.mrf.mxu0
        %801 = vmatprep.mubr.f32.mxu0 0.0
        %802 = vmatmul.mubr.f32.gmra.mxu0 %v339
        %v803 = vpop.f32.mrf.mxu0
        %v804 = vadd.f32 0.0, %v803
        %v805 = vpop.f32.mrf.mxu0
        %806 = vmatprep.mubr.f32.mxu0 0.0
        %807 = vmatmul.mubr.f32.gmra.mxu0 %v342
        %v808 = vpop.f32.mrf.mxu0
        %v809 = vadd.f32 0.0, %v808
        %v810 = vpop.f32.mrf.mxu0
        %811 = vmatprep.mubr.f32.mxu0 0.0
        %812 = vmatmul.mubr.f32.gmra.mxu0 %v345
        %v813 = vpop.f32.mrf.mxu0
        %v814 = vadd.f32 0.0, %v813
        %v815 = vpop.f32.mrf.mxu0
        %816 = vmatprep.mubr.f32.mxu0 0.0
        %817 = vmatmul.mubr.f32.gmra.mxu0 %v348
        %v818 = vpop.f32.mrf.mxu0
        %v819 = vadd.f32 0.0, %v818
        %v820 = vpop.f32.mrf.mxu0
        %821 = vmatprep.mubr.f32.mxu0 0.0
        %822 = vmatmul.mubr.f32.gmra.mxu0 %v351
        %v823 = vpop.f32.mrf.mxu0
        %v824 = vadd.f32 0.0, %v823
        %v825 = vpop.f32.mrf.mxu0
        %826 = vmatprep.mubr.f32.mxu0 0.0
        %827 = vmatmul.mubr.f32.gmra.mxu0 %v354
        %v828 = vpop.f32.mrf.mxu0
        %v829 = vadd.f32 0.0, %v828
        %v830 = vpop.f32.mrf.mxu0
        %831 = vmatprep.mubr.f32.mxu0 0.0
        %832 = vmatmul.mubr.f32.gmra.mxu0 %v357
        %v833 = vpop.f32.mrf.mxu0
        %v834 = vadd.f32 0.0, %v833
        %v835 = vpop.f32.mrf.mxu0
        %836 = vmatprep.mubr.f32.mxu0 0.0
        %837 = vmatmul.mubr.f32.gmra.mxu0 %v360
        %v838 = vpop.f32.mrf.mxu0
        %v839 = vadd.f32 0.0, %v838
        %v840 = vpop.f32.mrf.mxu0
        %841 = vmatprep.mubr.f32.mxu0 0.0
        %842 = vmatmul.mubr.f32.gmra.mxu0 %v363
        %v843 = vpop.f32.mrf.mxu0
        %v844 = vadd.f32 0.0, %v843
        %v845 = vpop.f32.mrf.mxu0
        %846 = vmatprep.mubr.f32.mxu0 0.0
        %847 = vmatmul.mubr.f32.gmra.mxu0 %v366
        %v848 = vpop.f32.mrf.mxu0
        %v849 = vadd.f32 0.0, %v848
        %v850 = vpop.f32.mrf.mxu0
        %851 = vmatprep.mubr.f32.mxu0 0.0
        %852 = vmatmul.mubr.f32.gmra.mxu0 %v369
        %v853 = vpop.f32.mrf.mxu0
        %v854 = vadd.f32 0.0, %v853
        %v855 = vpop.f32.mrf.mxu0
        %856 = vmatprep.mubr.f32.mxu0 0.0
        %857 = vmatmul.mubr.f32.gmra.mxu0 %v372
        %v858 = vpop.f32.mrf.mxu0
        %v859 = vadd.f32 0.0, %v858
        %v860 = vpop.f32.mrf.mxu0
        %861 = vmatprep.mubr.f32.mxu0 0.0
        %862 = vmatmul.mubr.f32.gmra.mxu0 %v375
        %v863 = vpop.f32.mrf.mxu0
        %v864 = vadd.f32 0.0, %v863
        %v865 = vpop.f32.mrf.mxu0
        %866 = vmatprep.mubr.f32.mxu0 0.0
        %867 = vmatmul.mubr.f32.gmra.mxu0 %v378
        %v868 = vpop.f32.mrf.mxu0
        %v869 = vadd.f32 0.0, %v868
        %v870 = vpop.f32.mrf.mxu0
        %871 = vmatprep.mubr.f32.mxu0 0.0
        %872 = vmatmul.mubr.f32.gmra.mxu0 %v381
        %v873 = vpop.f32.mrf.mxu0
        %v874 = vadd.f32 0.0, %v873
        %v875 = vpop.f32.mrf.mxu0
        %876 = vmatprep.mubr.f32.mxu0 0.0
        %877 = vmatmul.mubr.f32.gmra.mxu0 %v384
        %v878 = vpop.f32.mrf.mxu0
        %v879 = vadd.f32 0.0, %v878
        %v880 = vpop.f32.mrf.mxu0
        %881 = vmatprep.mubr.f32.mxu0 0.0
        %882 = vmatmul.mubr.f32.gmra.mxu0 %v387
        %v883 = vpop.f32.mrf.mxu0
        %v884 = vadd.f32 0.0, %v883
        %v885 = vpop.f32.mrf.mxu0
        %886 = vmatprep.mubr.f32.mxu0 0.0
        %887 = vmatmul.mubr.f32.gmra.mxu0 %v390
        %v888 = vpop.f32.mrf.mxu0
        %v889 = vadd.f32 0.0, %v888
        %v890 = vpop.f32.mrf.mxu0
        %891 = vmatprep.mubr.f32.mxu0 0.0
        %892 = vmatmul.mubr.f32.gmra.mxu0 %v393
        %v893 = vpop.f32.mrf.mxu0
        %v894 = vadd.f32 0.0, %v893
        %v895 = vpop.f32.mrf.mxu0
        %896 = vmatprep.mubr.f32.mxu0 0.0
        %897 = vmatmul.mubr.f32.gmra.mxu0 %v396
        %v898 = vpop.f32.mrf.mxu0
        %v899 = vadd.f32 0.0, %v898
        %v900 = vpop.f32.mrf.mxu0
        %901 = vmatprep.mubr.f32.mxu0 0.0
        %902 = vmatmul.mubr.f32.gmra.mxu0 %v399
        %v903 = vpop.f32.mrf.mxu0
        %v904 = vadd.f32 0.0, %v903
        %v905 = vpop.f32.mrf.mxu0
        %906 = vmatprep.mubr.f32.mxu0 0.0
        %907 = vmatmul.mubr.f32.gmra.mxu0 %v402
        %v908 = vpop.f32.mrf.mxu0
        %v909 = vadd.f32 0.0, %v908
        %v910 = vpop.f32.mrf.mxu0
        %911 = vmatprep.mubr.f32.mxu0 0.0
        %912 = vmatmul.mubr.f32.gmra.mxu0 %v405
        %v913 = vpop.f32.mrf.mxu0
        %v914 = vadd.f32 0.0, %v913
        %v915 = vpop.f32.mrf.mxu0
        %916 = vmatprep.mubr.f32.mxu0 0.0
        %917 = vmatmul.mubr.f32.gmra.mxu0 %v408
        %v918 = vpop.f32.mrf.mxu0
        %v919 = vadd.f32 0.0, %v918
        %v920 = vpop.f32.mrf.mxu0
        %921 = vmatprep.mubr.f32.mxu0 0.0
        %922 = vmatmul.mubr.f32.gmra.mxu0 %v411
        %v923 = vpop.f32.mrf.mxu0
        %v924 = vadd.f32 0.0, %v923
        %v925 = vpop.f32.mrf.mxu0
        %926 = vmatprep.mubr.f32.mxu0 0.0
        %927 = vmatmul.mubr.f32.gmra.mxu0 %v414
        %v928 = vpop.f32.mrf.mxu0
        %v929 = vadd.f32 0.0, %v928
        %v930 = vpop.f32.mrf.mxu0
        %931 = vmatprep.mubr.f32.mxu0 0.0
        %932 = vmatmul.mubr.f32.gmra.mxu0 %v417
        %v933 = vpop.f32.mrf.mxu0
        %v934 = vadd.f32 0.0, %v933
        %v935 = vpop.f32.mrf.mxu0
        %936 = vmatprep.mubr.f32.mxu0 0.0
        %937 = vmatmul.mubr.f32.gmra.mxu0 %v420
        %v938 = vpop.f32.mrf.mxu0
        %v939 = vadd.f32 0.0, %v938
        %v940 = vpop.f32.mrf.mxu0
        %941 = vmatprep.mubr.f32.mxu0 0.0
        %942 = vmatmul.mubr.f32.gmra.mxu0 %v423
        %v943 = vpop.f32.mrf.mxu0
        %v944 = vadd.f32 0.0, %v943
        %v945 = vpop.f32.mrf.mxu0
        %946 = vmatprep.mubr.f32.mxu0 0.0
        %947 = vmatmul.mubr.f32.gmra.mxu0 %v426
        %v948 = vpop.f32.mrf.mxu0
        %v949 = vadd.f32 0.0, %v948
        %v950 = vpop.f32.mrf.mxu0
        %951 = vmatprep.mubr.f32.mxu0 0.0
        %952 = vmatmul.mubr.f32.gmra.mxu0 %v429
        %v953 = vpop.f32.mrf.mxu0
        %v954 = vadd.f32 0.0, %v953
        %v955 = vpop.f32.mrf.mxu0
        %956 = vmatprep.mubr.f32.mxu0 0.0
        %957 = vmatmul.mubr.f32.gmra.mxu0 %v432
        %v958 = vpop.f32.mrf.mxu0
        %v959 = vadd.f32 0.0, %v958
        %v960 = vpop.f32.mrf.mxu0
        %961 = vmatprep.mubr.f32.mxu0 0.0
        %962 = vmatmul.mubr.f32.gmra.mxu0 %v435
        %v963 = vpop.f32.mrf.mxu0
        %v964 = vadd.f32 0.0, %v963
        %v965 = vpop.f32.mrf.mxu0
        %966 = vmatprep.mubr.f32.mxu0 0.0
        %967 = vmatmul.mubr.f32.gmra.mxu0 %v438
        %v968 = vpop.f32.mrf.mxu0
        %v969 = vadd.f32 0.0, %v968
        %v970 = vpop.f32.mrf.mxu0
        %971 = vmatprep.mubr.f32.mxu0 0.0
        %972 = vmatmul.mubr.f32.gmra.mxu0 %v441
        %v973 = vpop.f32.mrf.mxu0
        %v974 = vadd.f32 0.0, %v973
        %v975 = vpop.f32.mrf.mxu0
        %976 = vmatprep.mubr.f32.mxu0 0.0
        %977 = vmatmul.mubr.f32.gmra.mxu0 %v444
        %v978 = vpop.f32.mrf.mxu0
        %v979 = vadd.f32 0.0, %v978
        %v980 = vpop.f32.mrf.mxu0
        %981 = vmatprep.mubr.f32.mxu0 0.0
        %982 = vmatmul.mubr.f32.gmra.mxu0 %v447
        %v983 = vpop.f32.mrf.mxu0
        %v984 = vadd.f32 0.0, %v983
        %v985 = vpop.f32.mrf.mxu0
        %986 = vmatprep.mubr.f32.mxu0 0.0
        %987 = vmatmul.mubr.f32.gmra.mxu0 %v450
        %v988 = vpop.f32.mrf.mxu0
        %v989 = vadd.f32 0.0, %v988
        %v990 = vpop.f32.mrf.mxu0
        %991 = vmatprep.mubr.f32.mxu0 0.0
        %992 = vmatmul.mubr.f32.gmra.mxu0 %v453
        %v993 = vpop.f32.mrf.mxu0
        %v994 = vadd.f32 0.0, %v993
        %v995 = vpop.f32.mrf.mxu0
        %996 = vmatprep.mubr.f32.mxu0 0.0
        %997 = vmatmul.mubr.f32.gmra.mxu0 %v456
        %v998 = vpop.f32.mrf.mxu0
        %v999 = vadd.f32 0.0, %v998
        %v1000 = vpop.f32.mrf.mxu0
        %1001 = vmatprep.mubr.f32.mxu0 0.0
        %1002 = vmatmul.mubr.f32.gmra.mxu0 %v459
        %v1003 = vpop.f32.mrf.mxu0
        %v1004 = vadd.f32 0.0, %v1003
        %v1005 = vpop.f32.mrf.mxu0
        %1006 = vmatprep.mubr.f32.mxu0 0.0
        %1007 = vmatmul.mubr.f32.gmra.mxu0 %v462
        %v1008 = vpop.f32.mrf.mxu0
        %v1009 = vadd.f32 0.0, %v1008
        %v1010 = vpop.f32.mrf.mxu0
        %1011 = vmatprep.mubr.f32.mxu0 0.0
        %1012 = vmatmul.mubr.f32.gmra.mxu0 %v465
        %v1013 = vpop.f32.mrf.mxu0
        %v1014 = vadd.f32 0.0, %v1013
        %v1015 = vpop.f32.mrf.mxu0
        %1016 = vmatprep.mubr.f32.mxu0 0.0
        %1017 = vmatmul.mubr.f32.gmra.mxu0 %v468
        %v1018 = vpop.f32.mrf.mxu0
        %v1019 = vadd.f32 0.0, %v1018
        %v1020 = vpop.f32.mrf.mxu0
        %1021 = vmatprep.mubr.f32.mxu0 0.0
        %1022 = vmatmul.mubr.f32.gmra.mxu0 %v471
        %v1023 = vpop.f32.mrf.mxu0
        %v1024 = vadd.f32 0.0, %v1023
        %v1025 = vpop.f32.mrf.mxu0
        %1026 = vmatprep.mubr.f32.mxu0 0.0
        %1027 = vmatmul.mubr.f32.gmra.mxu0 %v474
        %v1028 = vpop.f32.mrf.mxu0
        %v1029 = vadd.f32 0.0, %v1028
        %v1030 = vpop.f32.mrf.mxu0
        %1031 = vmatprep.mubr.f32.mxu0 0.0
        %1032 = vmatmul.mubr.f32.gmra.mxu0 %v477
        %v1033 = vpop.f32.mrf.mxu0
        %v1034 = vadd.f32 0.0, %v1033
        %v1035 = vpop.f32.mrf.mxu0
        %1036 = vmatprep.mubr.f32.mxu0 0.0
        %1037 = vmatmul.mubr.f32.gmra.mxu0 %v480
        %v1038 = vpop.f32.mrf.mxu0
        %v1039 = vadd.f32 0.0, %v1038
        %v1040 = vpop.f32.mrf.mxu0
        %1041 = vmatprep.mubr.f32.mxu0 0.0
        %1042 = vmatmul.mubr.f32.gmra.mxu0 %v483
        %v1043 = vpop.f32.mrf.mxu0
        %v1044 = vadd.f32 0.0, %v1043
        %v1045 = vpop.f32.mrf.mxu0
        %1046 = vmatprep.mubr.f32.mxu0 0.0
        %1047 = vmatmul.mubr.f32.gmra.mxu0 %v486
        %v1048 = vpop.f32.mrf.mxu0
        %v1049 = vadd.f32 0.0, %v1048
        %v1050 = vpop.f32.mrf.mxu0
        %1051 = vmatprep.mubr.f32.mxu0 0.0
        %1052 = vmatmul.mubr.f32.gmra.mxu0 %v489
        %v1053 = vpop.f32.mrf.mxu0
        %v1054 = vadd.f32 0.0, %v1053
        %v1055 = vpop.f32.mrf.mxu0
        %1056 = vmatprep.mubr.f32.mxu0 0.0
        %1057 = vmatmul.mubr.f32.gmra.mxu0 %v492
        %v1058 = vpop.f32.mrf.mxu0
        %v1059 = vadd.f32 0.0, %v1058
        %v1060 = vpop.f32.mrf.mxu0
        %1061 = vmatprep.mubr.f32.mxu0 0.0
        %1062 = vmatmul.mubr.f32.gmra.mxu0 %v495
        %v1063 = vpop.f32.mrf.mxu0
        %v1064 = vadd.f32 0.0, %v1063
        %v1065 = vpop.f32.mrf.mxu0
        %1066 = vmatprep.mubr.f32.mxu0 0.0
        %1067 = vmatmul.mubr.f32.gmra.mxu0 %v498
        %v1068 = vpop.f32.mrf.mxu0
        %v1069 = vadd.f32 0.0, %v1068
        %v1070 = vpop.f32.mrf.mxu0
        %1071 = vmatprep.mubr.f32.mxu0 0.0
        %1072 = vmatmul.mubr.f32.gmra.mxu0 %v501
        %v1073 = vpop.f32.mrf.mxu0
        %v1074 = vadd.f32 0.0, %v1073
        %v1075 = vpop.f32.mrf.mxu0
        %1076 = vmatprep.mubr.f32.mxu0 0.0
        %1077 = vmatmul.mubr.f32.gmra.mxu0 %v504
        %v1078 = vpop.f32.mrf.mxu0
        %v1079 = vadd.f32 0.0, %v1078
        %v1080 = vpop.f32.mrf.mxu0
        %1081 = vmatprep.mubr.f32.mxu0 0.0
        %1082 = vmatmul.mubr.f32.gmra.mxu0 %v507
        %v1083 = vpop.f32.mrf.mxu0
        %v1084 = vadd.f32 0.0, %v1083
        %v1085 = vpop.f32.mrf.mxu0
        %1086 = vmatprep.mubr.f32.mxu0 0.0
        %1087 = vmatmul.mubr.f32.gmra.mxu0 %v510
        %v1088 = vpop.f32.mrf.mxu0
        %v1089 = vadd.f32 0.0, %v1088
        %v1090 = vpop.f32.mrf.mxu0
        %1091 = vmatprep.mubr.f32.mxu0 0.0
        %1092 = vmatmul.mubr.f32.gmra.mxu0 %v513
        %v1093 = vpop.f32.mrf.mxu0
        %v1094 = vadd.f32 0.0, %v1093
        %v1095 = vpop.f32.mrf.mxu0
        %1096 = vmatprep.mubr.f32.mxu0 0.0
        %1097 = vmatmul.mubr.f32.gmra.mxu0 %v516
        %v1098 = vpop.f32.mrf.mxu0
        %v1099 = vadd.f32 0.0, %v1098
        %v1100 = vpop.f32.mrf.mxu0
        %1101 = vmatprep.mubr.f32.mxu0 0.0
        %1102 = vmatmul.mubr.f32.gmra.mxu0 %v519
        %v1103 = vpop.f32.mrf.mxu0
        %v1104 = vadd.f32 0.0, %v1103
        %v1105 = vpop.f32.mrf.mxu0
        %1106 = vmatprep.mubr.f32.mxu0 0.0
        %1107 = vmatmul.mubr.f32.gmra.mxu0 %v522
        %v1108 = vpop.f32.mrf.mxu0
        %v1109 = vadd.f32 0.0, %v1108
        %v1110 = vpop.f32.mrf.mxu0
        %1111 = vmatprep.mubr.f32.mxu0 0.0
        %1112 = vmatmul.mubr.f32.gmra.mxu0 %v525
        %v1113 = vpop.f32.mrf.mxu0
        %v1114 = vadd.f32 0.0, %v1113
        %v1115 = vpop.f32.mrf.mxu0
        %1116 = vmatprep.mubr.f32.mxu0 0.0
        %1117 = vmatmul.mubr.f32.gmra.mxu0 %v528
        %v1118 = vpop.f32.mrf.mxu0
        %v1119 = vadd.f32 0.0, %v1118
        %v1120 = vpop.f32.mrf.mxu0
        %1121 = vmatprep.mubr.f32.mxu0 0.0
        %1122 = vmatmul.mubr.f32.gmra.mxu0 %v531
        %v1123 = vpop.f32.mrf.mxu0
        %v1124 = vadd.f32 0.0, %v1123
        %v1125 = vpop.f32.mrf.mxu0
        %1126 = vmatprep.mubr.f32.mxu0 0.0
        %1127 = vmatmul.mubr.f32.gmra.mxu0 %v534
        %v1128 = vpop.f32.mrf.mxu0
        %v1129 = vadd.f32 0.0, %v1128
        %v1130 = vpop.f32.mrf.mxu0
        %1131 = vmatprep.mubr.f32.mxu0 0.0
        %1132 = vmatmul.mubr.f32.gmra.mxu0 %v537
        %v1133 = vpop.f32.mrf.mxu0
        %v1134 = vadd.f32 0.0, %v1133
        %v1135 = vpop.f32.mrf.mxu0
        %1136 = vmatprep.mubr.f32.mxu0 0.0
        %1137 = vmatmul.mubr.f32.gmra.mxu0 %v540
        %v1138 = vpop.f32.mrf.mxu0
        %v1139 = vadd.f32 0.0, %v1138
        %v1140 = vpop.f32.mrf.mxu0
        %1141 = vmatprep.mubr.f32.mxu0 0.0
        %1142 = vmatmul.mubr.f32.gmra.mxu0 %v543
        %v1143 = vpop.f32.mrf.mxu0
        %v1144 = vadd.f32 0.0, %v1143
        %v1145 = vpop.f32.mrf.mxu0
        %1146 = vmatprep.mubr.f32.mxu0 0.0
        %1147 = vmatmul.mubr.f32.gmra.mxu0 %v546
        %v1148 = vpop.f32.mrf.mxu0
        %v1149 = vadd.f32 0.0, %v1148
        %v1150 = vpop.f32.mrf.mxu0
        %1151 = vmatprep.mubr.f32.mxu0 0.0
        %1152 = vmatmul.mubr.f32.gmra.mxu0 %v549
        %v1153 = vpop.f32.mrf.mxu0
        %v1154 = vadd.f32 0.0, %v1153
        %v1155 = vpop.f32.mrf.mxu0
        %1156 = vmatprep.mubr.f32.mxu0 0.0
        %1157 = vmatmul.mubr.f32.gmra.mxu0 %v552
        %v1158 = vpop.f32.mrf.mxu0
        %v1159 = vadd.f32 0.0, %v1158
        %v1160 = vpop.f32.mrf.mxu0
        %1161 = vmatprep.mubr.f32.mxu0 0.0
        %1162 = vmatmul.mubr.f32.gmra.mxu0 %v555
        %v1163 = vpop.f32.mrf.mxu0
        %v1164 = vadd.f32 0.0, %v1163
        %v1165 = vpop.f32.mrf.mxu0
        %1166 = vmatprep.mubr.f32.mxu0 0.0
        %1167 = vmatmul.mubr.f32.gmra.mxu0 %v558
        %v1168 = vpop.f32.mrf.mxu0
        %v1169 = vadd.f32 0.0, %v1168
        %v1170 = vpop.f32.mrf.mxu0
        %1171 = vmatprep.mubr.f32.mxu0 0.0
        %1172 = vmatmul.mubr.f32.gmra.mxu0 %v561
        %v1173 = vpop.f32.mrf.mxu0
        %v1174 = vadd.f32 0.0, %v1173
        %v1175 = vpop.f32.mrf.mxu0
        %1176 = vmatprep.mubr.f32.mxu0 0.0
        %1177 = vmatmul.mubr.f32.gmra.mxu0 %v564
        %v1178 = vpop.f32.mrf.mxu0
        %v1179 = vadd.f32 0.0, %v1178
        %v1180 = vpop.f32.mrf.mxu0
        %1181 = vmatprep.mubr.f32.mxu0 0.0
        %1182 = vmatmul.mubr.f32.gmra.mxu0 %v567
        %v1183 = vpop.f32.mrf.mxu0
        %v1184 = vadd.f32 0.0, %v1183
        %v1185 = vpop.f32.mrf.mxu0
        %1186 = vmatprep.mubr.f32.mxu0 0.0
        %1187 = vmatmul.mubr.f32.gmra.mxu0 %v570
        %v1188 = vpop.f32.mrf.mxu0
        %v1189 = vadd.f32 0.0, %v1188
        %v1190 = vpop.f32.mrf.mxu0
        %1191 = vmatprep.mubr.f32.mxu0 0.0
        %1192 = vmatmul.mubr.f32.gmra.mxu0 %v573
        %v1193 = vpop.f32.mrf.mxu0
        %v1194 = vadd.f32 0.0, %v1193
        %v1195 = vpop.f32.mrf.mxu0
        %1196 = vmatprep.mubr.f32.mxu0 0.0
        %1197 = vmatmul.mubr.f32.gmra.mxu0 %v576
        %v1198 = vpop.f32.mrf.mxu0
        %v1199 = vadd.f32 0.0, %v1198
        %v1200 = vpop.f32.mrf.mxu0
        %1201 = vmatprep.mubr.f32.mxu0 0.0
        %1202 = vmatmul.mubr.f32.gmra.mxu0 %v579
        %v1203 = vpop.f32.mrf.mxu0
        %v1204 = vadd.f32 0.0, %v1203
        %v1205 = vpop.f32.mrf.mxu0
        %1206 = vmatprep.mubr.f32.mxu0 0.0
        %1207 = vmatmul.mubr.f32.gmra.mxu0 %v582
        %v1208 = vpop.f32.mrf.mxu0
        %v1209 = vadd.f32 0.0, %v1208
        %v1210 = vpop.f32.mrf.mxu0
        %1211 = vmatprep.mubr.f32.mxu0 0.0
        %1212 = vmatmul.mubr.f32.gmra.mxu0 %v585
        %v1213 = vpop.f32.mrf.mxu0
        %v1214 = vadd.f32 0.0, %v1213
        %v1215 = vpop.f32.mrf.mxu0
        %1216 = vmatprep.mubr.f32.mxu0 0.0
        %1217 = vmatmul.mubr.f32.gmra.mxu0 %v588
        %v1218 = vpop.f32.mrf.mxu0
        %v1219 = vadd.f32 0.0, %v1218
        %v1220 = vpop.f32.mrf.mxu0
        %1221 = vmatprep.mubr.f32.mxu0 0.0
        %1222 = vmatmul.mubr.f32.gmra.mxu0 %v591
        %v1223 = vpop.f32.mrf.mxu0
        %v1224 = vadd.f32 0.0, %v1223
        %v1225 = vpop.f32.mrf.mxu0
        %1226 = vmatprep.mubr.f32.mxu0 0.0
        %1227 = vmatmul.mubr.f32.gmra.mxu0 %v594
        %v1228 = vpop.f32.mrf.mxu0
        %v1229 = vadd.f32 0.0, %v1228
        %v1230 = vpop.f32.mrf.mxu0
        %1231 = vmatprep.mubr.f32.mxu0 0.0
        %1232 = vmatmul.mubr.f32.gmra.mxu0 %v597
        %v1233 = vpop.f32.mrf.mxu0
        %v1234 = vadd.f32 0.0, %v1233
        %v1235 = vpop.f32.mrf.mxu0
        %1236 = vmatprep.mubr.f32.mxu0 0.0
        %1237 = vmatmul.mubr.f32.gmra.mxu0 %v600
        %v1238 = vpop.f32.mrf.mxu0
        %v1239 = vadd.f32 0.0, %v1238
        %v1240 = vpop.f32.mrf.mxu0
        %1241 = vmatprep.mubr.f32.mxu0 0.0
        %1242 = vmatmul.mubr.f32.gmra.mxu0 %v603
        %v1243 = vpop.f32.mrf.mxu0
        %v1244 = vadd.f32 0.0, %v1243
        %v1245 = vpop.f32.mrf.mxu0
        %1246 = vmatprep.mubr.f32.mxu0 0.0
        %1247 = vmatmul.mubr.f32.gmra.mxu0 %v606
        %v1248 = vpop.f32.mrf.mxu0
        %v1249 = vadd.f32 0.0, %v1248
        %v1250 = vpop.f32.mrf.mxu0
        %1251 = vmatprep.mubr.f32.mxu0 0.0
        %1252 = vmatmul.mubr.f32.gmra.mxu0 %v609
        %v1253 = vpop.f32.mrf.mxu0
        %v1254 = vadd.f32 0.0, %v1253
        %v1255 = vpop.f32.mrf.mxu0
        %1256 = vmatprep.mubr.f32.mxu0 0.0
        %1257 = vmatmul.mubr.f32.gmra.mxu0 %v612
        %v1258 = vpop.f32.mrf.mxu0
        %v1259 = vadd.f32 0.0, %v1258
        %v1260 = vpop.f32.mrf.mxu0
        %1261 = vmatprep.mubr.f32.mxu0 0.0
        %1262 = vmatmul.mubr.f32.gmra.mxu0 %v615
        %v1263 = vpop.f32.mrf.mxu0
        %v1264 = vadd.f32 0.0, %v1263
        %v1265 = vpop.f32.mrf.mxu0
        %1266 = vmatprep.mubr.f32.mxu0 0.0
        %1267 = vmatmul.mubr.f32.gmra.mxu0 %v618
        %v1268 = vpop.f32.mrf.mxu0
        %v1269 = vadd.f32 0.0, %v1268
        %v1270 = vpop.f32.mrf.mxu0
        %1271 = vmatprep.mubr.f32.mxu0 0.0
        %1272 = vmatmul.mubr.f32.gmra.mxu0 %v621
        %v1273 = vpop.f32.mrf.mxu0
        %v1274 = vadd.f32 0.0, %v1273
        %v1275 = vpop.f32.mrf.mxu0
        %1276 = vmatprep.mubr.f32.mxu0 0.0
        %1277 = vmatmul.mubr.f32.gmra.mxu0 %v624
        %v1278 = vpop.f32.mrf.mxu0
        %v1279 = vadd.f32 0.0, %v1278
        %v1280 = vpop.f32.mrf.mxu0
        %1281 = vmatprep.mubr.f32.mxu0 0.0
        %1282 = vmatmul.mubr.f32.gmra.mxu0 %v627
        %v1283 = vpop.f32.mrf.mxu0
        %v1284 = vadd.f32 0.0, %v1283
        %v1285 = vpop.f32.mrf.mxu0
        %1286 = vmatprep.mubr.f32.mxu0 0.0
        %1287 = vmatmul.mubr.f32.gmra.mxu0 %v630
        %v1288 = vpop.f32.mrf.mxu0
        %v1289 = vadd.f32 0.0, %v1288
        %v1290 = vpop.f32.mrf.mxu0
        %1291 = vmatprep.mubr.f32.mxu0 0.0
        %1292 = vmatmul.mubr.f32.gmra.mxu0 %v633
        %v1293 = vpop.f32.mrf.mxu0
        %v1294 = vadd.f32 0.0, %v1293
        %v1295 = vpop.f32.mrf.mxu0
        %1296 = vmatprep.mubr.f32.mxu0 0.0
        %1297 = vmatmul.mubr.f32.gmra.mxu0 %v636
        %v1298 = vpop.f32.mrf.mxu0
        %v1299 = vadd.f32 0.0, %v1298
        %v1300 = vpop.f32.mrf.mxu0
        %1301 = vmatprep.mubr.f32.mxu0 0.0
        %1302 = vmatmul.mubr.f32.gmra.mxu0 %v639
        %v1303 = vpop.f32.mrf.mxu0
        %v1304 = vadd.f32 0.0, %v1303
        %v1305 = vpop.f32.mrf.mxu0
        %1306 = vmatprep.mubr.f32.mxu0 0.0
        %1307 = vmatmul.mubr.f32.gmra.mxu0 %v642
        %v1308 = vpop.f32.mrf.mxu0
        %v1309 = vadd.f32 0.0, %v1308
        %v1310 = vpop.f32.mrf.mxu0
        %1311 = vmatprep.mubr.f32.mxu0 0.0
        %1312 = vmatmul.mubr.f32.gmra.mxu0 %v645
        %v1313 = vpop.f32.mrf.mxu0
        %v1314 = vadd.f32 0.0, %v1313
        %v1315 = vpop.f32.mrf.mxu0
        %1316 = vmatprep.mubr.f32.mxu0 0.0
        %1317 = vmatmul.mubr.f32.gmra.mxu0 %v648
        %v1318 = vpop.f32.mrf.mxu0
        %v1319 = vadd.f32 0.0, %v1318
        %v1320 = vpop.f32.mrf.mxu0
        %1321 = vmatprep.mubr.f32.mxu0 0.0
        %1322 = vmatmul.mubr.f32.gmra.mxu0 %v651
        %v1323 = vpop.f32.mrf.mxu0
        %v1324 = vadd.f32 0.0, %v1323
        %v1325 = vpop.f32.mrf.mxu0
        %1326 = vmatprep.mubr.f32.mxu0 0.0
        %1327 = vmatmul.mubr.f32.gmra.mxu0 %v654
        %v1328 = vpop.f32.mrf.mxu0
        %v1329 = vadd.f32 0.0, %v1328
        %v1330 = vpop.f32.mrf.mxu0
        %1331 = vmatprep.mubr.f32.mxu0 0.0
        %1332 = vmatmul.mubr.f32.gmra.mxu0 %v657
        %v1333 = vpop.f32.mrf.mxu0
        %v1334 = vadd.f32 0.0, %v1333
        %v1335 = vpop.f32.mrf.mxu0
        %1336 = vmatprep.mubr.f32.mxu0 0.0
        %1337 = vmatmul.mubr.f32.gmra.mxu0 %v660
        %v1338 = vpop.f32.mrf.mxu0
        %v1339 = vadd.f32 0.0, %v1338
        %v1340 = vpop.f32.mrf.mxu0
        %1341 = vmatprep.mubr.f32.mxu0 0.0
        %1342 = vmatmul.mubr.f32.gmra.mxu0 %v663
        %v1343 = vpop.f32.mrf.mxu0
        %v1344 = vadd.f32 0.0, %v1343
        %v1345 = vpop.f32.mrf.mxu0
        %1346 = vmatprep.mubr.f32.mxu0 0.0
        %1347 = vmatmul.mubr.f32.gmra.mxu0 %v666
        %v1348 = vpop.f32.mrf.mxu0
        %v1349 = vadd.f32 0.0, %v1348
        %v1350 = vpop.f32.mrf.mxu0
        %1351 = vmatprep.mubr.f32.mxu0 0.0
        %1352 = vmatmul.mubr.f32.gmra.mxu0 %v669
        %v1353 = vpop.f32.mrf.mxu0
        %v1354 = vadd.f32 0.0, %v1353
        %v1355 = vpop.f32.mrf.mxu0
        %1356 = vmatprep.mubr.f32.mxu0 0.0
        %1357 = vmatmul.mubr.f32.gmra.mxu0 %v672
        %v1358 = vpop.f32.mrf.mxu0
        %v1359 = vadd.f32 0.0, %v1358
        %v1360 = vpop.f32.mrf.mxu0
        %1361 = vmatprep.mubr.f32.mxu0 0.0
        %1362 = vmatmul.mubr.f32.gmra.mxu0 %v675
        %v1363 = vpop.f32.mrf.mxu0
        %v1364 = vadd.f32 0.0, %v1363
        %v1365 = vpop.f32.mrf.mxu0
        %1366 = vdwg.mxu0
        %v1367 = vld [vmem:[%s2] sm:$0xff]
        %v1368 = vld [vmem:[%s2 + $0x8] sm:$0xff]
        %v1369 = vld [vmem:[%s2 + $0x10] sm:$0xff]
        %v1370 = vld [vmem:[%s2 + $0x18] sm:$0xff]
        %v1371 = vld [vmem:[%s2 + $0x20] sm:$0xff]
        %v1372 = vld [vmem:[%s2 + $0x28] sm:$0xff]
        %v1373 = vld [vmem:[%s2 + $0x30] sm:$0xff]
        %v1374 = vld [vmem:[%s2 + $0x38] sm:$0xff]
        %vm1375 = vcmask 523264
        %v1377 = vsel %vm1375, %v744, 0
        %v1380 = vsel %vm1375, %v749, 0
        %v1383 = vsel %vm1375, %v754, 0
        %v1386 = vsel %vm1375, %v759, 0
        %v1389 = vsel %vm1375, %v764, 0
        %v1392 = vsel %vm1375, %v769, 0
        %v1395 = vsel %vm1375, %v774, 0
        %v1398 = vsel %vm1375, %v779, 0
        %v1401 = vsel %vm1375, %v784, 0
        %v1404 = vsel %vm1375, %v789, 0
        %v1407 = vsel %vm1375, %v794, 0
        %v1410 = vsel %vm1375, %v799, 0
        %v1413 = vsel %vm1375, %v804, 0
        %v1416 = vsel %vm1375, %v809, 0
        %v1419 = vsel %vm1375, %v814, 0
        %v1422 = vsel %vm1375, %v819, 0
        %v1425 = vsel %vm1375, %v824, 0
        %v1428 = vsel %vm1375, %v829, 0
        %v1431 = vsel %vm1375, %v834, 0
        %v1434 = vsel %vm1375, %v839, 0
        %v1437 = vsel %vm1375, %v844, 0
        %v1440 = vsel %vm1375, %v849, 0
        %v1443 = vsel %vm1375, %v854, 0
        %v1446 = vsel %vm1375, %v859, 0
        %v1449 = vsel %vm1375, %v864, 0
        %v1452 = vsel %vm1375, %v869, 0
        %v1455 = vsel %vm1375, %v874, 0
        %v1458 = vsel %vm1375, %v879, 0
        %v1461 = vsel %vm1375, %v884, 0
        %v1464 = vsel %vm1375, %v889, 0
        %v1467 = vsel %vm1375, %v894, 0
        %v1470 = vsel %vm1375, %v899, 0
        %v1473 = vsel %vm1375, %v904, 0
        %v1476 = vsel %vm1375, %v909, 0
        %v1479 = vsel %vm1375, %v914, 0
        %v1482 = vsel %vm1375, %v919, 0
        %v1485 = vsel %vm1375, %v924, 0
        %v1488 = vsel %vm1375, %v929, 0
        %v1491 = vsel %vm1375, %v934, 0
        %v1494 = vsel %vm1375, %v939, 0
        %v1497 = vsel %vm1375, %v944, 0
        %v1500 = vsel %vm1375, %v949, 0
        %v1503 = vsel %vm1375, %v954, 0
        %v1506 = vsel %vm1375, %v959, 0
        %v1509 = vsel %vm1375, %v964, 0
        %v1512 = vsel %vm1375, %v969, 0
        %v1515 = vsel %vm1375, %v974, 0
        %v1518 = vsel %vm1375, %v979, 0
        %v1521 = vsel %vm1375, %v984, 0
        %v1524 = vsel %vm1375, %v989, 0
        %v1527 = vsel %vm1375, %v994, 0
        %v1530 = vsel %vm1375, %v999, 0
        %v1533 = vsel %vm1375, %v1004, 0
        %v1536 = vsel %vm1375, %v1009, 0
        %v1539 = vsel %vm1375, %v1014, 0
        %v1542 = vsel %vm1375, %v1019, 0
        %v1545 = vsel %vm1375, %v1024, 0
        %v1548 = vsel %vm1375, %v1029, 0
        %v1551 = vsel %vm1375, %v1034, 0
        %v1554 = vsel %vm1375, %v1039, 0
        %v1557 = vsel %vm1375, %v1044, 0
        %v1560 = vsel %vm1375, %v1049, 0
        %v1563 = vsel %vm1375, %v1054, 0
        %v1566 = vsel %vm1375, %v1059, 0
        %v1569 = vsel %vm1375, %v1064, 0
        %v1572 = vsel %vm1375, %v1069, 0
        %v1575 = vsel %vm1375, %v1074, 0
        %v1578 = vsel %vm1375, %v1079, 0
        %v1581 = vsel %vm1375, %v1084, 0
        %v1584 = vsel %vm1375, %v1089, 0
        %v1587 = vsel %vm1375, %v1094, 0
        %v1590 = vsel %vm1375, %v1099, 0
        %v1593 = vsel %vm1375, %v1104, 0
        %v1596 = vsel %vm1375, %v1109, 0
        %v1599 = vsel %vm1375, %v1114, 0
        %v1602 = vsel %vm1375, %v1119, 0
        %v1605 = vsel %vm1375, %v1124, 0
        %v1608 = vsel %vm1375, %v1129, 0
        %v1611 = vsel %vm1375, %v1134, 0
        %v1614 = vsel %vm1375, %v1139, 0
        %v1617 = vsel %vm1375, %v1144, 0
        %v1620 = vsel %vm1375, %v1149, 0
        %v1623 = vsel %vm1375, %v1154, 0
        %v1626 = vsel %vm1375, %v1159, 0
        %v1629 = vsel %vm1375, %v1164, 0
        %v1632 = vsel %vm1375, %v1169, 0
        %v1635 = vsel %vm1375, %v1174, 0
        %v1638 = vsel %vm1375, %v1179, 0
        %v1641 = vsel %vm1375, %v1184, 0
        %v1644 = vsel %vm1375, %v1189, 0
        %v1647 = vsel %vm1375, %v1194, 0
        %v1650 = vsel %vm1375, %v1199, 0
        %v1653 = vsel %vm1375, %v1204, 0
        %v1656 = vsel %vm1375, %v1209, 0
        %v1659 = vsel %vm1375, %v1214, 0
        %v1662 = vsel %vm1375, %v1219, 0
        %v1665 = vsel %vm1375, %v1224, 0
        %v1668 = vsel %vm1375, %v1229, 0
        %v1671 = vsel %vm1375, %v1234, 0
        %v1674 = vsel %vm1375, %v1239, 0
        %v1677 = vsel %vm1375, %v1244, 0
        %v1680 = vsel %vm1375, %v1249, 0
        %v1683 = vsel %vm1375, %v1254, 0
        %v1686 = vsel %vm1375, %v1259, 0
        %v1689 = vsel %vm1375, %v1264, 0
        %v1692 = vsel %vm1375, %v1269, 0
        %v1695 = vsel %vm1375, %v1274, 0
        %v1698 = vsel %vm1375, %v1279, 0
        %v1701 = vsel %vm1375, %v1284, 0
        %v1704 = vsel %vm1375, %v1289, 0
        %v1707 = vsel %vm1375, %v1294, 0
        %v1710 = vsel %vm1375, %v1299, 0
        %v1713 = vsel %vm1375, %v1304, 0
        %v1716 = vsel %vm1375, %v1309, 0
        %v1719 = vsel %vm1375, %v1314, 0
        %v1722 = vsel %vm1375, %v1319, 0
        %v1725 = vsel %vm1375, %v1324, 0
        %v1728 = vsel %vm1375, %v1329, 0
        %v1731 = vsel %vm1375, %v1334, 0
        %v1734 = vsel %vm1375, %v1339, 0
        %v1737 = vsel %vm1375, %v1344, 0
        %v1740 = vsel %vm1375, %v1349, 0
        %v1743 = vsel %vm1375, %v1354, 0
        %v1746 = vsel %vm1375, %v1359, 0
        %v1749 = vsel %vm1375, %v1364, 0
        %1751 = vmatprep.subr.mxu0 0.0
        %1752 = vmatpush1.msra.mxu0 0.0
        %1753 = vmatprep.subr.mxu0 0.0
        %1754 = vmatpush1.msra.mxu0 0.0
        %1755 = vmatprep.subr.mxu0 0.0
        %1756 = vmatpush1.msra.mxu0 0.0
        %1757 = vmatprep.subr.mxu0 0.0
        %1758 = vmatpush1.msra.mxu0 0.0
        %1759 = vmatprep.subr.mxu0 0.0
        %1760 = vmatpush1.msra.mxu0 0.0
        %1761 = vmatprep.subr.mxu0 0.0
        %1762 = vmatpush1.msra.mxu0 0.0
        %1763 = vmatprep.subr.mxu0 0.0
        %1764 = vmatpush1.msra.mxu0 0.0
        %1765 = vmatprep.subr.mxu0 0.0
        %1766 = vmatpush1.msra.mxu0 0.0
        %1767 = vmatprep.subr.mxu0 0.0
        %1768 = vmatpush1.msra.mxu0 %v1374
        %1769 = vmatprep.subr.mxu0 0.0
        %1770 = vmatpush1.msra.mxu0 %v1373
        %1771 = vmatprep.subr.mxu0 0.0
        %1772 = vmatpush1.msra.mxu0 %v1372
        %1773 = vmatprep.subr.mxu0 0.0
        %1774 = vmatpush1.msra.mxu0 %v1371
        %1775 = vmatprep.subr.mxu0 0.0
        %1776 = vmatpush1.msra.mxu0 %v1370
        %1777 = vmatprep.subr.mxu0 0.0
        %1778 = vmatpush1.msra.mxu0 %v1369
        %1779 = vmatprep.subr.mxu0 0.0
        %1780 = vmatpush1.msra.mxu0 %v1368
        %1781 = vmatprep.subr.mxu0 0.0
        %1782 = vmatpush1.msra.mxu0 %v1367
        %1783 = vmatprep.subr.mxu0 0.0
        %1784 = vmatpush2.msra.mxu0 0.0
        %1785 = vmatprep.subr.mxu0 0.0
        %1786 = vmatpush2.msra.mxu0 0.0
        %1787 = vmatprep.subr.mxu0 0.0
        %1788 = vmatpush2.msra.mxu0 0.0
        %1789 = vmatprep.subr.mxu0 0.0
        %1790 = vmatpush2.msra.mxu0 0.0
        %1791 = vmatprep.subr.mxu0 0.0
        %1792 = vmatpush2.msra.mxu0 0.0
        %1793 = vmatprep.subr.mxu0 0.0
        %1794 = vmatpush2.msra.mxu0 0.0
        %1795 = vmatprep.subr.mxu0 0.0
        %1796 = vmatpush2.msra.mxu0 0.0
        %1797 = vmatprep.subr.mxu0 0.0
        %1798 = vmatpush2.msra.mxu0 0.0
        %1799 = vmatprep.subr.mxu0 0.0
        %1800 = vmatpush2.msra.mxu0 0.0
        %1801 = vmatprep.subr.mxu0 0.0
        %1802 = vmatpush2.msra.mxu0 0.0
        %1803 = vmatprep.subr.mxu0 0.0
        %1804 = vmatpush2.msra.mxu0 0.0
        %1805 = vmatprep.subr.mxu0 0.0
        %1806 = vmatpush2.msra.mxu0 0.0
        %1807 = vmatprep.subr.mxu0 0.0
        %1808 = vmatpush2.msra.mxu0 0.0
        %1809 = vmatprep.subr.mxu0 0.0
        %1810 = vmatpush2.msra.mxu0 0.0
        %1811 = vmatprep.subr.mxu0 0.0
        %1812 = vmatpush2.msra.mxu0 0.0
        %1813 = vmatprep.subr.mxu0 0.0
        %1814 = vmatpush2.msra.mxu0 0.0
        %1815 = vmatprep.mubr.f32.mxu0 0.0
        %1816 = vmatmul.mubr.f32.gmra.mxu0 %v1377
        %v1817 = vpop.f32.mrf.mxu0
        %v1818 = vadd.f32 0.0, %v1817
        %v1819 = vpop.f32.mrf.mxu0
        %1820 = vmatprep.mubr.f32.mxu0 0.0
        %1821 = vmatmul.mubr.f32.gmra.mxu0 %v1380
        %v1822 = vpop.f32.mrf.mxu0
        %v1823 = vadd.f32 0.0, %v1822
        %v1824 = vpop.f32.mrf.mxu0
        %1825 = vmatprep.mubr.f32.mxu0 0.0
        %1826 = vmatmul.mubr.f32.gmra.mxu0 %v1383
        %v1827 = vpop.f32.mrf.mxu0
        %v1828 = vadd.f32 0.0, %v1827
        %v1829 = vpop.f32.mrf.mxu0
        %1830 = vmatprep.mubr.f32.mxu0 0.0
        %1831 = vmatmul.mubr.f32.gmra.mxu0 %v1386
        %v1832 = vpop.f32.mrf.mxu0
        %v1833 = vadd.f32 0.0, %v1832
        %v1834 = vpop.f32.mrf.mxu0
        %1835 = vmatprep.mubr.f32.mxu0 0.0
        %1836 = vmatmul.mubr.f32.gmra.mxu0 %v1389
        %v1837 = vpop.f32.mrf.mxu0
        %v1838 = vadd.f32 0.0, %v1837
        %v1839 = vpop.f32.mrf.mxu0
        %1840 = vmatprep.mubr.f32.mxu0 0.0
        %1841 = vmatmul.mubr.f32.gmra.mxu0 %v1392
        %v1842 = vpop.f32.mrf.mxu0
        %v1843 = vadd.f32 0.0, %v1842
        %v1844 = vpop.f32.mrf.mxu0
        %1845 = vmatprep.mubr.f32.mxu0 0.0
        %1846 = vmatmul.mubr.f32.gmra.mxu0 %v1395
        %v1847 = vpop.f32.mrf.mxu0
        %v1848 = vadd.f32 0.0, %v1847
        %v1849 = vpop.f32.mrf.mxu0
        %1850 = vmatprep.mubr.f32.mxu0 0.0
        %1851 = vmatmul.mubr.f32.gmra.mxu0 %v1398
        %v1852 = vpop.f32.mrf.mxu0
        %v1853 = vadd.f32 0.0, %v1852
        %v1854 = vpop.f32.mrf.mxu0
        %1855 = vmatprep.mubr.f32.mxu0 0.0
        %1856 = vmatmul.mubr.f32.gmra.mxu0 %v1401
        %v1857 = vpop.f32.mrf.mxu0
        %v1858 = vadd.f32 0.0, %v1857
        %v1859 = vpop.f32.mrf.mxu0
        %1860 = vmatprep.mubr.f32.mxu0 0.0
        %1861 = vmatmul.mubr.f32.gmra.mxu0 %v1404
        %v1862 = vpop.f32.mrf.mxu0
        %v1863 = vadd.f32 0.0, %v1862
        %v1864 = vpop.f32.mrf.mxu0
        %1865 = vmatprep.mubr.f32.mxu0 0.0
        %1866 = vmatmul.mubr.f32.gmra.mxu0 %v1407
        %v1867 = vpop.f32.mrf.mxu0
        %v1868 = vadd.f32 0.0, %v1867
        %v1869 = vpop.f32.mrf.mxu0
        %1870 = vmatprep.mubr.f32.mxu0 0.0
        %1871 = vmatmul.mubr.f32.gmra.mxu0 %v1410
        %v1872 = vpop.f32.mrf.mxu0
        %v1873 = vadd.f32 0.0, %v1872
        %v1874 = vpop.f32.mrf.mxu0
        %1875 = vmatprep.mubr.f32.mxu0 0.0
        %1876 = vmatmul.mubr.f32.gmra.mxu0 %v1413
        %v1877 = vpop.f32.mrf.mxu0
        %v1878 = vadd.f32 0.0, %v1877
        %v1879 = vpop.f32.mrf.mxu0
        %1880 = vmatprep.mubr.f32.mxu0 0.0
        %1881 = vmatmul.mubr.f32.gmra.mxu0 %v1416
        %v1882 = vpop.f32.mrf.mxu0
        %v1883 = vadd.f32 0.0, %v1882
        %v1884 = vpop.f32.mrf.mxu0
        %1885 = vmatprep.mubr.f32.mxu0 0.0
        %1886 = vmatmul.mubr.f32.gmra.mxu0 %v1419
        %v1887 = vpop.f32.mrf.mxu0
        %v1888 = vadd.f32 0.0, %v1887
        %v1889 = vpop.f32.mrf.mxu0
        %1890 = vmatprep.mubr.f32.mxu0 0.0
        %1891 = vmatmul.mubr.f32.gmra.mxu0 %v1422
        %v1892 = vpop.f32.mrf.mxu0
        %v1893 = vadd.f32 0.0, %v1892
        %v1894 = vpop.f32.mrf.mxu0
        %1895 = vmatprep.mubr.f32.mxu0 0.0
        %1896 = vmatmul.mubr.f32.gmra.mxu0 %v1425
        %v1897 = vpop.f32.mrf.mxu0
        %v1898 = vadd.f32 0.0, %v1897
        %v1899 = vpop.f32.mrf.mxu0
        %1900 = vmatprep.mubr.f32.mxu0 0.0
        %1901 = vmatmul.mubr.f32.gmra.mxu0 %v1428
        %v1902 = vpop.f32.mrf.mxu0
        %v1903 = vadd.f32 0.0, %v1902
        %v1904 = vpop.f32.mrf.mxu0
        %1905 = vmatprep.mubr.f32.mxu0 0.0
        %1906 = vmatmul.mubr.f32.gmra.mxu0 %v1431
        %v1907 = vpop.f32.mrf.mxu0
        %v1908 = vadd.f32 0.0, %v1907
        %v1909 = vpop.f32.mrf.mxu0
        %1910 = vmatprep.mubr.f32.mxu0 0.0
        %1911 = vmatmul.mubr.f32.gmra.mxu0 %v1434
        %v1912 = vpop.f32.mrf.mxu0
        %v1913 = vadd.f32 0.0, %v1912
        %v1914 = vpop.f32.mrf.mxu0
        %1915 = vmatprep.mubr.f32.mxu0 0.0
        %1916 = vmatmul.mubr.f32.gmra.mxu0 %v1437
        %v1917 = vpop.f32.mrf.mxu0
        %v1918 = vadd.f32 0.0, %v1917
        %v1919 = vpop.f32.mrf.mxu0
        %1920 = vmatprep.mubr.f32.mxu0 0.0
        %1921 = vmatmul.mubr.f32.gmra.mxu0 %v1440
        %v1922 = vpop.f32.mrf.mxu0
        %v1923 = vadd.f32 0.0, %v1922
        %v1924 = vpop.f32.mrf.mxu0
        %1925 = vmatprep.mubr.f32.mxu0 0.0
        %1926 = vmatmul.mubr.f32.gmra.mxu0 %v1443
        %v1927 = vpop.f32.mrf.mxu0
        %v1928 = vadd.f32 0.0, %v1927
        %v1929 = vpop.f32.mrf.mxu0
        %1930 = vmatprep.mubr.f32.mxu0 0.0
        %1931 = vmatmul.mubr.f32.gmra.mxu0 %v1446
        %v1932 = vpop.f32.mrf.mxu0
        %v1933 = vadd.f32 0.0, %v1932
        %v1934 = vpop.f32.mrf.mxu0
        %1935 = vmatprep.mubr.f32.mxu0 0.0
        %1936 = vmatmul.mubr.f32.gmra.mxu0 %v1449
        %v1937 = vpop.f32.mrf.mxu0
        %v1938 = vadd.f32 0.0, %v1937
        %v1939 = vpop.f32.mrf.mxu0
        %1940 = vmatprep.mubr.f32.mxu0 0.0
        %1941 = vmatmul.mubr.f32.gmra.mxu0 %v1452
        %v1942 = vpop.f32.mrf.mxu0
        %v1943 = vadd.f32 0.0, %v1942
        %v1944 = vpop.f32.mrf.mxu0
        %1945 = vmatprep.mubr.f32.mxu0 0.0
        %1946 = vmatmul.mubr.f32.gmra.mxu0 %v1455
        %v1947 = vpop.f32.mrf.mxu0
        %v1948 = vadd.f32 0.0, %v1947
        %v1949 = vpop.f32.mrf.mxu0
        %1950 = vmatprep.mubr.f32.mxu0 0.0
        %1951 = vmatmul.mubr.f32.gmra.mxu0 %v1458
        %v1952 = vpop.f32.mrf.mxu0
        %v1953 = vadd.f32 0.0, %v1952
        %v1954 = vpop.f32.mrf.mxu0
        %1955 = vmatprep.mubr.f32.mxu0 0.0
        %1956 = vmatmul.mubr.f32.gmra.mxu0 %v1461
        %v1957 = vpop.f32.mrf.mxu0
        %v1958 = vadd.f32 0.0, %v1957
        %v1959 = vpop.f32.mrf.mxu0
        %1960 = vmatprep.mubr.f32.mxu0 0.0
        %1961 = vmatmul.mubr.f32.gmra.mxu0 %v1464
        %v1962 = vpop.f32.mrf.mxu0
        %v1963 = vadd.f32 0.0, %v1962
        %v1964 = vpop.f32.mrf.mxu0
        %1965 = vmatprep.mubr.f32.mxu0 0.0
        %1966 = vmatmul.mubr.f32.gmra.mxu0 %v1467
        %v1967 = vpop.f32.mrf.mxu0
        %v1968 = vadd.f32 0.0, %v1967
        %v1969 = vpop.f32.mrf.mxu0
        %1970 = vmatprep.mubr.f32.mxu0 0.0
        %1971 = vmatmul.mubr.f32.gmra.mxu0 %v1470
        %v1972 = vpop.f32.mrf.mxu0
        %v1973 = vadd.f32 0.0, %v1972
        %v1974 = vpop.f32.mrf.mxu0
        %1975 = vmatprep.mubr.f32.mxu0 0.0
        %1976 = vmatmul.mubr.f32.gmra.mxu0 %v1473
        %v1977 = vpop.f32.mrf.mxu0
        %v1978 = vadd.f32 0.0, %v1977
        %v1979 = vpop.f32.mrf.mxu0
        %1980 = vmatprep.mubr.f32.mxu0 0.0
        %1981 = vmatmul.mubr.f32.gmra.mxu0 %v1476
        %v1982 = vpop.f32.mrf.mxu0
        %v1983 = vadd.f32 0.0, %v1982
        %v1984 = vpop.f32.mrf.mxu0
        %1985 = vmatprep.mubr.f32.mxu0 0.0
        %1986 = vmatmul.mubr.f32.gmra.mxu0 %v1479
        %v1987 = vpop.f32.mrf.mxu0
        %v1988 = vadd.f32 0.0, %v1987
        %v1989 = vpop.f32.mrf.mxu0
        %1990 = vmatprep.mubr.f32.mxu0 0.0
        %1991 = vmatmul.mubr.f32.gmra.mxu0 %v1482
        %v1992 = vpop.f32.mrf.mxu0
        %v1993 = vadd.f32 0.0, %v1992
        %v1994 = vpop.f32.mrf.mxu0
        %1995 = vmatprep.mubr.f32.mxu0 0.0
        %1996 = vmatmul.mubr.f32.gmra.mxu0 %v1485
        %v1997 = vpop.f32.mrf.mxu0
        %v1998 = vadd.f32 0.0, %v1997
        %v1999 = vpop.f32.mrf.mxu0
        %2000 = vmatprep.mubr.f32.mxu0 0.0
        %2001 = vmatmul.mubr.f32.gmra.mxu0 %v1488
        %v2002 = vpop.f32.mrf.mxu0
        %v2003 = vadd.f32 0.0, %v2002
        %v2004 = vpop.f32.mrf.mxu0
        %2005 = vmatprep.mubr.f32.mxu0 0.0
        %2006 = vmatmul.mubr.f32.gmra.mxu0 %v1491
        %v2007 = vpop.f32.mrf.mxu0
        %v2008 = vadd.f32 0.0, %v2007
        %v2009 = vpop.f32.mrf.mxu0
        %2010 = vmatprep.mubr.f32.mxu0 0.0
        %2011 = vmatmul.mubr.f32.gmra.mxu0 %v1494
        %v2012 = vpop.f32.mrf.mxu0
        %v2013 = vadd.f32 0.0, %v2012
        %v2014 = vpop.f32.mrf.mxu0
        %2015 = vmatprep.mubr.f32.mxu0 0.0
        %2016 = vmatmul.mubr.f32.gmra.mxu0 %v1497
        %v2017 = vpop.f32.mrf.mxu0
        %v2018 = vadd.f32 0.0, %v2017
        %v2019 = vpop.f32.mrf.mxu0
        %2020 = vmatprep.mubr.f32.mxu0 0.0
        %2021 = vmatmul.mubr.f32.gmra.mxu0 %v1500
        %v2022 = vpop.f32.mrf.mxu0
        %v2023 = vadd.f32 0.0, %v2022
        %v2024 = vpop.f32.mrf.mxu0
        %2025 = vmatprep.mubr.f32.mxu0 0.0
        %2026 = vmatmul.mubr.f32.gmra.mxu0 %v1503
        %v2027 = vpop.f32.mrf.mxu0
        %v2028 = vadd.f32 0.0, %v2027
        %v2029 = vpop.f32.mrf.mxu0
        %2030 = vmatprep.mubr.f32.mxu0 0.0
        %2031 = vmatmul.mubr.f32.gmra.mxu0 %v1506
        %v2032 = vpop.f32.mrf.mxu0
        %v2033 = vadd.f32 0.0, %v2032
        %v2034 = vpop.f32.mrf.mxu0
        %2035 = vmatprep.mubr.f32.mxu0 0.0
        %2036 = vmatmul.mubr.f32.gmra.mxu0 %v1509
        %v2037 = vpop.f32.mrf.mxu0
        %v2038 = vadd.f32 0.0, %v2037
        %v2039 = vpop.f32.mrf.mxu0
        %2040 = vmatprep.mubr.f32.mxu0 0.0
        %2041 = vmatmul.mubr.f32.gmra.mxu0 %v1512
        %v2042 = vpop.f32.mrf.mxu0
        %v2043 = vadd.f32 0.0, %v2042
        %v2044 = vpop.f32.mrf.mxu0
        %2045 = vmatprep.mubr.f32.mxu0 0.0
        %2046 = vmatmul.mubr.f32.gmra.mxu0 %v1515
        %v2047 = vpop.f32.mrf.mxu0
        %v2048 = vadd.f32 0.0, %v2047
        %v2049 = vpop.f32.mrf.mxu0
        %2050 = vmatprep.mubr.f32.mxu0 0.0
        %2051 = vmatmul.mubr.f32.gmra.mxu0 %v1518
        %v2052 = vpop.f32.mrf.mxu0
        %v2053 = vadd.f32 0.0, %v2052
        %v2054 = vpop.f32.mrf.mxu0
        %2055 = vmatprep.mubr.f32.mxu0 0.0
        %2056 = vmatmul.mubr.f32.gmra.mxu0 %v1521
        %v2057 = vpop.f32.mrf.mxu0
        %v2058 = vadd.f32 0.0, %v2057
        %v2059 = vpop.f32.mrf.mxu0
        %2060 = vmatprep.mubr.f32.mxu0 0.0
        %2061 = vmatmul.mubr.f32.gmra.mxu0 %v1524
        %v2062 = vpop.f32.mrf.mxu0
        %v2063 = vadd.f32 0.0, %v2062
        %v2064 = vpop.f32.mrf.mxu0
        %2065 = vmatprep.mubr.f32.mxu0 0.0
        %2066 = vmatmul.mubr.f32.gmra.mxu0 %v1527
        %v2067 = vpop.f32.mrf.mxu0
        %v2068 = vadd.f32 0.0, %v2067
        %v2069 = vpop.f32.mrf.mxu0
        %2070 = vmatprep.mubr.f32.mxu0 0.0
        %2071 = vmatmul.mubr.f32.gmra.mxu0 %v1530
        %v2072 = vpop.f32.mrf.mxu0
        %v2073 = vadd.f32 0.0, %v2072
        %v2074 = vpop.f32.mrf.mxu0
        %2075 = vmatprep.mubr.f32.mxu0 0.0
        %2076 = vmatmul.mubr.f32.gmra.mxu0 %v1533
        %v2077 = vpop.f32.mrf.mxu0
        %v2078 = vadd.f32 0.0, %v2077
        %v2079 = vpop.f32.mrf.mxu0
        %2080 = vmatprep.mubr.f32.mxu0 0.0
        %2081 = vmatmul.mubr.f32.gmra.mxu0 %v1536
        %v2082 = vpop.f32.mrf.mxu0
        %v2083 = vadd.f32 0.0, %v2082
        %v2084 = vpop.f32.mrf.mxu0
        %2085 = vmatprep.mubr.f32.mxu0 0.0
        %2086 = vmatmul.mubr.f32.gmra.mxu0 %v1539
        %v2087 = vpop.f32.mrf.mxu0
        %v2088 = vadd.f32 0.0, %v2087
        %v2089 = vpop.f32.mrf.mxu0
        %2090 = vmatprep.mubr.f32.mxu0 0.0
        %2091 = vmatmul.mubr.f32.gmra.mxu0 %v1542
        %v2092 = vpop.f32.mrf.mxu0
        %v2093 = vadd.f32 0.0, %v2092
        %v2094 = vpop.f32.mrf.mxu0
        %2095 = vmatprep.mubr.f32.mxu0 0.0
        %2096 = vmatmul.mubr.f32.gmra.mxu0 %v1545
        %v2097 = vpop.f32.mrf.mxu0
        %v2098 = vadd.f32 0.0, %v2097
        %v2099 = vpop.f32.mrf.mxu0
        %2100 = vmatprep.mubr.f32.mxu0 0.0
        %2101 = vmatmul.mubr.f32.gmra.mxu0 %v1548
        %v2102 = vpop.f32.mrf.mxu0
        %v2103 = vadd.f32 0.0, %v2102
        %v2104 = vpop.f32.mrf.mxu0
        %2105 = vmatprep.mubr.f32.mxu0 0.0
        %2106 = vmatmul.mubr.f32.gmra.mxu0 %v1551
        %v2107 = vpop.f32.mrf.mxu0
        %v2108 = vadd.f32 0.0, %v2107
        %v2109 = vpop.f32.mrf.mxu0
        %2110 = vmatprep.mubr.f32.mxu0 0.0
        %2111 = vmatmul.mubr.f32.gmra.mxu0 %v1554
        %v2112 = vpop.f32.mrf.mxu0
        %v2113 = vadd.f32 0.0, %v2112
        %v2114 = vpop.f32.mrf.mxu0
        %2115 = vmatprep.mubr.f32.mxu0 0.0
        %2116 = vmatmul.mubr.f32.gmra.mxu0 %v1557
        %v2117 = vpop.f32.mrf.mxu0
        %v2118 = vadd.f32 0.0, %v2117
        %v2119 = vpop.f32.mrf.mxu0
        %2120 = vmatprep.mubr.f32.mxu0 0.0
        %2121 = vmatmul.mubr.f32.gmra.mxu0 %v1560
        %v2122 = vpop.f32.mrf.mxu0
        %v2123 = vadd.f32 0.0, %v2122
        %v2124 = vpop.f32.mrf.mxu0
        %2125 = vmatprep.mubr.f32.mxu0 0.0
        %2126 = vmatmul.mubr.f32.gmra.mxu0 %v1563
        %v2127 = vpop.f32.mrf.mxu0
        %v2128 = vadd.f32 0.0, %v2127
        %v2129 = vpop.f32.mrf.mxu0
        %2130 = vmatprep.mubr.f32.mxu0 0.0
        %2131 = vmatmul.mubr.f32.gmra.mxu0 %v1566
        %v2132 = vpop.f32.mrf.mxu0
        %v2133 = vadd.f32 0.0, %v2132
        %v2134 = vpop.f32.mrf.mxu0
        %2135 = vmatprep.mubr.f32.mxu0 0.0
        %2136 = vmatmul.mubr.f32.gmra.mxu0 %v1569
        %v2137 = vpop.f32.mrf.mxu0
        %v2138 = vadd.f32 0.0, %v2137
        %v2139 = vpop.f32.mrf.mxu0
        %2140 = vmatprep.mubr.f32.mxu0 0.0
        %2141 = vmatmul.mubr.f32.gmra.mxu0 %v1572
        %v2142 = vpop.f32.mrf.mxu0
        %v2143 = vadd.f32 0.0, %v2142
        %v2144 = vpop.f32.mrf.mxu0
        %2145 = vmatprep.mubr.f32.mxu0 0.0
        %2146 = vmatmul.mubr.f32.gmra.mxu0 %v1575
        %v2147 = vpop.f32.mrf.mxu0
        %v2148 = vadd.f32 0.0, %v2147
        %v2149 = vpop.f32.mrf.mxu0
        %2150 = vmatprep.mubr.f32.mxu0 0.0
        %2151 = vmatmul.mubr.f32.gmra.mxu0 %v1578
        %v2152 = vpop.f32.mrf.mxu0
        %v2153 = vadd.f32 0.0, %v2152
        %v2154 = vpop.f32.mrf.mxu0
        %2155 = vmatprep.mubr.f32.mxu0 0.0
        %2156 = vmatmul.mubr.f32.gmra.mxu0 %v1581
        %v2157 = vpop.f32.mrf.mxu0
        %v2158 = vadd.f32 0.0, %v2157
        %v2159 = vpop.f32.mrf.mxu0
        %2160 = vmatprep.mubr.f32.mxu0 0.0
        %2161 = vmatmul.mubr.f32.gmra.mxu0 %v1584
        %v2162 = vpop.f32.mrf.mxu0
        %v2163 = vadd.f32 0.0, %v2162
        %v2164 = vpop.f32.mrf.mxu0
        %2165 = vmatprep.mubr.f32.mxu0 0.0
        %2166 = vmatmul.mubr.f32.gmra.mxu0 %v1587
        %v2167 = vpop.f32.mrf.mxu0
        %v2168 = vadd.f32 0.0, %v2167
        %v2169 = vpop.f32.mrf.mxu0
        %2170 = vmatprep.mubr.f32.mxu0 0.0
        %2171 = vmatmul.mubr.f32.gmra.mxu0 %v1590
        %v2172 = vpop.f32.mrf.mxu0
        %v2173 = vadd.f32 0.0, %v2172
        %v2174 = vpop.f32.mrf.mxu0
        %2175 = vmatprep.mubr.f32.mxu0 0.0
        %2176 = vmatmul.mubr.f32.gmra.mxu0 %v1593
        %v2177 = vpop.f32.mrf.mxu0
        %v2178 = vadd.f32 0.0, %v2177
        %v2179 = vpop.f32.mrf.mxu0
        %2180 = vmatprep.mubr.f32.mxu0 0.0
        %2181 = vmatmul.mubr.f32.gmra.mxu0 %v1596
        %v2182 = vpop.f32.mrf.mxu0
        %v2183 = vadd.f32 0.0, %v2182
        %v2184 = vpop.f32.mrf.mxu0
        %2185 = vmatprep.mubr.f32.mxu0 0.0
        %2186 = vmatmul.mubr.f32.gmra.mxu0 %v1599
        %v2187 = vpop.f32.mrf.mxu0
        %v2188 = vadd.f32 0.0, %v2187
        %v2189 = vpop.f32.mrf.mxu0
        %2190 = vmatprep.mubr.f32.mxu0 0.0
        %2191 = vmatmul.mubr.f32.gmra.mxu0 %v1602
        %v2192 = vpop.f32.mrf.mxu0
        %v2193 = vadd.f32 0.0, %v2192
        %v2194 = vpop.f32.mrf.mxu0
        %2195 = vmatprep.mubr.f32.mxu0 0.0
        %2196 = vmatmul.mubr.f32.gmra.mxu0 %v1605
        %v2197 = vpop.f32.mrf.mxu0
        %v2198 = vadd.f32 0.0, %v2197
        %v2199 = vpop.f32.mrf.mxu0
        %2200 = vmatprep.mubr.f32.mxu0 0.0
        %2201 = vmatmul.mubr.f32.gmra.mxu0 %v1608
        %v2202 = vpop.f32.mrf.mxu0
        %v2203 = vadd.f32 0.0, %v2202
        %v2204 = vpop.f32.mrf.mxu0
        %2205 = vmatprep.mubr.f32.mxu0 0.0
        %2206 = vmatmul.mubr.f32.gmra.mxu0 %v1611
        %v2207 = vpop.f32.mrf.mxu0
        %v2208 = vadd.f32 0.0, %v2207
        %v2209 = vpop.f32.mrf.mxu0
        %2210 = vmatprep.mubr.f32.mxu0 0.0
        %2211 = vmatmul.mubr.f32.gmra.mxu0 %v1614
        %v2212 = vpop.f32.mrf.mxu0
        %v2213 = vadd.f32 0.0, %v2212
        %v2214 = vpop.f32.mrf.mxu0
        %2215 = vmatprep.mubr.f32.mxu0 0.0
        %2216 = vmatmul.mubr.f32.gmra.mxu0 %v1617
        %v2217 = vpop.f32.mrf.mxu0
        %v2218 = vadd.f32 0.0, %v2217
        %v2219 = vpop.f32.mrf.mxu0
        %2220 = vmatprep.mubr.f32.mxu0 0.0
        %2221 = vmatmul.mubr.f32.gmra.mxu0 %v1620
        %v2222 = vpop.f32.mrf.mxu0
        %v2223 = vadd.f32 0.0, %v2222
        %v2224 = vpop.f32.mrf.mxu0
        %2225 = vmatprep.mubr.f32.mxu0 0.0
        %2226 = vmatmul.mubr.f32.gmra.mxu0 %v1623
        %v2227 = vpop.f32.mrf.mxu0
        %v2228 = vadd.f32 0.0, %v2227
        %v2229 = vpop.f32.mrf.mxu0
        %2230 = vmatprep.mubr.f32.mxu0 0.0
        %2231 = vmatmul.mubr.f32.gmra.mxu0 %v1626
        %v2232 = vpop.f32.mrf.mxu0
        %v2233 = vadd.f32 0.0, %v2232
        %v2234 = vpop.f32.mrf.mxu0
        %2235 = vmatprep.mubr.f32.mxu0 0.0
        %2236 = vmatmul.mubr.f32.gmra.mxu0 %v1629
        %v2237 = vpop.f32.mrf.mxu0
        %v2238 = vadd.f32 0.0, %v2237
        %v2239 = vpop.f32.mrf.mxu0
        %2240 = vmatprep.mubr.f32.mxu0 0.0
        %2241 = vmatmul.mubr.f32.gmra.mxu0 %v1632
        %v2242 = vpop.f32.mrf.mxu0
        %v2243 = vadd.f32 0.0, %v2242
        %v2244 = vpop.f32.mrf.mxu0
        %2245 = vmatprep.mubr.f32.mxu0 0.0
        %2246 = vmatmul.mubr.f32.gmra.mxu0 %v1635
        %v2247 = vpop.f32.mrf.mxu0
        %v2248 = vadd.f32 0.0, %v2247
        %v2249 = vpop.f32.mrf.mxu0
        %2250 = vmatprep.mubr.f32.mxu0 0.0
        %2251 = vmatmul.mubr.f32.gmra.mxu0 %v1638
        %v2252 = vpop.f32.mrf.mxu0
        %v2253 = vadd.f32 0.0, %v2252
        %v2254 = vpop.f32.mrf.mxu0
        %2255 = vmatprep.mubr.f32.mxu0 0.0
        %2256 = vmatmul.mubr.f32.gmra.mxu0 %v1641
        %v2257 = vpop.f32.mrf.mxu0
        %v2258 = vadd.f32 0.0, %v2257
        %v2259 = vpop.f32.mrf.mxu0
        %2260 = vmatprep.mubr.f32.mxu0 0.0
        %2261 = vmatmul.mubr.f32.gmra.mxu0 %v1644
        %v2262 = vpop.f32.mrf.mxu0
        %v2263 = vadd.f32 0.0, %v2262
        %v2264 = vpop.f32.mrf.mxu0
        %2265 = vmatprep.mubr.f32.mxu0 0.0
        %2266 = vmatmul.mubr.f32.gmra.mxu0 %v1647
        %v2267 = vpop.f32.mrf.mxu0
        %v2268 = vadd.f32 0.0, %v2267
        %v2269 = vpop.f32.mrf.mxu0
        %2270 = vmatprep.mubr.f32.mxu0 0.0
        %2271 = vmatmul.mubr.f32.gmra.mxu0 %v1650
        %v2272 = vpop.f32.mrf.mxu0
        %v2273 = vadd.f32 0.0, %v2272
        %v2274 = vpop.f32.mrf.mxu0
        %2275 = vmatprep.mubr.f32.mxu0 0.0
        %2276 = vmatmul.mubr.f32.gmra.mxu0 %v1653
        %v2277 = vpop.f32.mrf.mxu0
        %v2278 = vadd.f32 0.0, %v2277
        %v2279 = vpop.f32.mrf.mxu0
        %2280 = vmatprep.mubr.f32.mxu0 0.0
        %2281 = vmatmul.mubr.f32.gmra.mxu0 %v1656
        %v2282 = vpop.f32.mrf.mxu0
        %v2283 = vadd.f32 0.0, %v2282
        %v2284 = vpop.f32.mrf.mxu0
        %2285 = vmatprep.mubr.f32.mxu0 0.0
        %2286 = vmatmul.mubr.f32.gmra.mxu0 %v1659
        %v2287 = vpop.f32.mrf.mxu0
        %v2288 = vadd.f32 0.0, %v2287
        %v2289 = vpop.f32.mrf.mxu0
        %2290 = vmatprep.mubr.f32.mxu0 0.0
        %2291 = vmatmul.mubr.f32.gmra.mxu0 %v1662
        %v2292 = vpop.f32.mrf.mxu0
        %v2293 = vadd.f32 0.0, %v2292
        %v2294 = vpop.f32.mrf.mxu0
        %2295 = vmatprep.mubr.f32.mxu0 0.0
        %2296 = vmatmul.mubr.f32.gmra.mxu0 %v1665
        %v2297 = vpop.f32.mrf.mxu0
        %v2298 = vadd.f32 0.0, %v2297
        %v2299 = vpop.f32.mrf.mxu0
        %2300 = vmatprep.mubr.f32.mxu0 0.0
        %2301 = vmatmul.mubr.f32.gmra.mxu0 %v1668
        %v2302 = vpop.f32.mrf.mxu0
        %v2303 = vadd.f32 0.0, %v2302
        %v2304 = vpop.f32.mrf.mxu0
        %2305 = vmatprep.mubr.f32.mxu0 0.0
        %2306 = vmatmul.mubr.f32.gmra.mxu0 %v1671
        %v2307 = vpop.f32.mrf.mxu0
        %v2308 = vadd.f32 0.0, %v2307
        %v2309 = vpop.f32.mrf.mxu0
        %2310 = vmatprep.mubr.f32.mxu0 0.0
        %2311 = vmatmul.mubr.f32.gmra.mxu0 %v1674
        %v2312 = vpop.f32.mrf.mxu0
        %v2313 = vadd.f32 0.0, %v2312
        %v2314 = vpop.f32.mrf.mxu0
        %2315 = vmatprep.mubr.f32.mxu0 0.0
        %2316 = vmatmul.mubr.f32.gmra.mxu0 %v1677
        %v2317 = vpop.f32.mrf.mxu0
        %v2318 = vadd.f32 0.0, %v2317
        %v2319 = vpop.f32.mrf.mxu0
        %2320 = vmatprep.mubr.f32.mxu0 0.0
        %2321 = vmatmul.mubr.f32.gmra.mxu0 %v1680
        %v2322 = vpop.f32.mrf.mxu0
        %v2323 = vadd.f32 0.0, %v2322
        %v2324 = vpop.f32.mrf.mxu0
        %2325 = vmatprep.mubr.f32.mxu0 0.0
        %2326 = vmatmul.mubr.f32.gmra.mxu0 %v1683
        %v2327 = vpop.f32.mrf.mxu0
        %v2328 = vadd.f32 0.0, %v2327
        %v2329 = vpop.f32.mrf.mxu0
        %2330 = vmatprep.mubr.f32.mxu0 0.0
        %2331 = vmatmul.mubr.f32.gmra.mxu0 %v1686
        %v2332 = vpop.f32.mrf.mxu0
        %v2333 = vadd.f32 0.0, %v2332
        %v2334 = vpop.f32.mrf.mxu0
        %2335 = vmatprep.mubr.f32.mxu0 0.0
        %2336 = vmatmul.mubr.f32.gmra.mxu0 %v1689
        %v2337 = vpop.f32.mrf.mxu0
        %v2338 = vadd.f32 0.0, %v2337
        %v2339 = vpop.f32.mrf.mxu0
        %2340 = vmatprep.mubr.f32.mxu0 0.0
        %2341 = vmatmul.mubr.f32.gmra.mxu0 %v1692
        %v2342 = vpop.f32.mrf.mxu0
        %v2343 = vadd.f32 0.0, %v2342
        %v2344 = vpop.f32.mrf.mxu0
        %2345 = vmatprep.mubr.f32.mxu0 0.0
        %2346 = vmatmul.mubr.f32.gmra.mxu0 %v1695
        %v2347 = vpop.f32.mrf.mxu0
        %v2348 = vadd.f32 0.0, %v2347
        %v2349 = vpop.f32.mrf.mxu0
        %2350 = vmatprep.mubr.f32.mxu0 0.0
        %2351 = vmatmul.mubr.f32.gmra.mxu0 %v1698
        %v2352 = vpop.f32.mrf.mxu0
        %v2353 = vadd.f32 0.0, %v2352
        %v2354 = vpop.f32.mrf.mxu0
        %2355 = vmatprep.mubr.f32.mxu0 0.0
        %2356 = vmatmul.mubr.f32.gmra.mxu0 %v1701
        %v2357 = vpop.f32.mrf.mxu0
        %v2358 = vadd.f32 0.0, %v2357
        %v2359 = vpop.f32.mrf.mxu0
        %2360 = vmatprep.mubr.f32.mxu0 0.0
        %2361 = vmatmul.mubr.f32.gmra.mxu0 %v1704
        %v2362 = vpop.f32.mrf.mxu0
        %v2363 = vadd.f32 0.0, %v2362
        %v2364 = vpop.f32.mrf.mxu0
        %2365 = vmatprep.mubr.f32.mxu0 0.0
        %2366 = vmatmul.mubr.f32.gmra.mxu0 %v1707
        %v2367 = vpop.f32.mrf.mxu0
        %v2368 = vadd.f32 0.0, %v2367
        %v2369 = vpop.f32.mrf.mxu0
        %2370 = vmatprep.mubr.f32.mxu0 0.0
        %2371 = vmatmul.mubr.f32.gmra.mxu0 %v1710
        %v2372 = vpop.f32.mrf.mxu0
        %v2373 = vadd.f32 0.0, %v2372
        %v2374 = vpop.f32.mrf.mxu0
        %2375 = vmatprep.mubr.f32.mxu0 0.0
        %2376 = vmatmul.mubr.f32.gmra.mxu0 %v1713
        %v2377 = vpop.f32.mrf.mxu0
        %v2378 = vadd.f32 0.0, %v2377
        %v2379 = vpop.f32.mrf.mxu0
        %2380 = vmatprep.mubr.f32.mxu0 0.0
        %2381 = vmatmul.mubr.f32.gmra.mxu0 %v1716
        %v2382 = vpop.f32.mrf.mxu0
        %v2383 = vadd.f32 0.0, %v2382
        %v2384 = vpop.f32.mrf.mxu0
        %2385 = vmatprep.mubr.f32.mxu0 0.0
        %2386 = vmatmul.mubr.f32.gmra.mxu0 %v1719
        %v2387 = vpop.f32.mrf.mxu0
        %v2388 = vadd.f32 0.0, %v2387
        %v2389 = vpop.f32.mrf.mxu0
        %2390 = vmatprep.mubr.f32.mxu0 0.0
        %2391 = vmatmul.mubr.f32.gmra.mxu0 %v1722
        %v2392 = vpop.f32.mrf.mxu0
        %v2393 = vadd.f32 0.0, %v2392
        %v2394 = vpop.f32.mrf.mxu0
        %2395 = vmatprep.mubr.f32.mxu0 0.0
        %2396 = vmatmul.mubr.f32.gmra.mxu0 %v1725
        %v2397 = vpop.f32.mrf.mxu0
        %v2398 = vadd.f32 0.0, %v2397
        %v2399 = vpop.f32.mrf.mxu0
        %2400 = vmatprep.mubr.f32.mxu0 0.0
        %2401 = vmatmul.mubr.f32.gmra.mxu0 %v1728
        %v2402 = vpop.f32.mrf.mxu0
        %v2403 = vadd.f32 0.0, %v2402
        %v2404 = vpop.f32.mrf.mxu0
        %2405 = vmatprep.mubr.f32.mxu0 0.0
        %2406 = vmatmul.mubr.f32.gmra.mxu0 %v1731
        %v2407 = vpop.f32.mrf.mxu0
        %v2408 = vadd.f32 0.0, %v2407
        %v2409 = vpop.f32.mrf.mxu0
        %2410 = vmatprep.mubr.f32.mxu0 0.0
        %2411 = vmatmul.mubr.f32.gmra.mxu0 %v1734
        %v2412 = vpop.f32.mrf.mxu0
        %v2413 = vadd.f32 0.0, %v2412
        %v2414 = vpop.f32.mrf.mxu0
        %2415 = vmatprep.mubr.f32.mxu0 0.0
        %2416 = vmatmul.mubr.f32.gmra.mxu0 %v1737
        %v2417 = vpop.f32.mrf.mxu0
        %v2418 = vadd.f32 0.0, %v2417
        %v2419 = vpop.f32.mrf.mxu0
        %2420 = vmatprep.mubr.f32.mxu0 0.0
        %2421 = vmatmul.mubr.f32.gmra.mxu0 %v1740
        %v2422 = vpop.f32.mrf.mxu0
        %v2423 = vadd.f32 0.0, %v2422
        %v2424 = vpop.f32.mrf.mxu0
        %2425 = vmatprep.mubr.f32.mxu0 0.0
        %2426 = vmatmul.mubr.f32.gmra.mxu0 %v1743
        %v2427 = vpop.f32.mrf.mxu0
        %v2428 = vadd.f32 0.0, %v2427
        %v2429 = vpop.f32.mrf.mxu0
        %2430 = vmatprep.mubr.f32.mxu0 0.0
        %2431 = vmatmul.mubr.f32.gmra.mxu0 %v1746
        %v2432 = vpop.f32.mrf.mxu0
        %v2433 = vadd.f32 0.0, %v2432
        %v2434 = vpop.f32.mrf.mxu0
        %2435 = vmatprep.mubr.f32.mxu0 0.0
        %2436 = vmatmul.mubr.f32.gmra.mxu0 %v1749
        %v2437 = vpop.f32.mrf.mxu0
        %v2438 = vadd.f32 0.0, %v2437
        %v2439 = vpop.f32.mrf.mxu0
        %2440 = vdwg.mxu0
        %2441 = vst [vmem:[%s164] sm:$0xff] %v1818
        %2442 = vst [vmem:[%s164 + $0x8] sm:$0xff] %v1823
        %2443 = vst [vmem:[%s164 + $0x10] sm:$0xff] %v1828
        %2444 = vst [vmem:[%s164 + $0x18] sm:$0xff] %v1833
        %2445 = vst [vmem:[%s164 + $0x20] sm:$0xff] %v1838
        %2446 = vst [vmem:[%s164 + $0x28] sm:$0xff] %v1843
        %2447 = vst [vmem:[%s164 + $0x30] sm:$0xff] %v1848
        %2448 = vst [vmem:[%s164 + $0x38] sm:$0xff] %v1853
        %2449 = vst [vmem:[%s164 + $0x40] sm:$0xff] %v1858
        %2450 = vst [vmem:[%s164 + $0x48] sm:$0xff] %v1863
        %2451 = vst [vmem:[%s164 + $0x50] sm:$0xff] %v1868
        %2452 = vst [vmem:[%s164 + $0x58] sm:$0xff] %v1873
        %2453 = vst [vmem:[%s164 + $0x60] sm:$0xff] %v1878
        %2454 = vst [vmem:[%s164 + $0x68] sm:$0xff] %v1883
        %2455 = vst [vmem:[%s164 + $0x70] sm:$0xff] %v1888
        %2456 = vst [vmem:[%s164 + $0x78] sm:$0xff] %v1893
        %2457 = vst [vmem:[%s164 + $0x80] sm:$0xff] %v1898
        %2458 = vst [vmem:[%s164 + $0x88] sm:$0xff] %v1903
        %2459 = vst [vmem:[%s164 + $0x90] sm:$0xff] %v1908
        %2460 = vst [vmem:[%s164 + $0x98] sm:$0xff] %v1913
        %2461 = vst [vmem:[%s164 + $0xa0] sm:$0xff] %v1918
        %2462 = vst [vmem:[%s164 + $0xa8] sm:$0xff] %v1923
        %2463 = vst [vmem:[%s164 + $0xb0] sm:$0xff] %v1928
        %2464 = vst [vmem:[%s164 + $0xb8] sm:$0xff] %v1933
        %2465 = vst [vmem:[%s164 + $0xc0] sm:$0xff] %v1938
        %2466 = vst [vmem:[%s164 + $0xc8] sm:$0xff] %v1943
        %2467 = vst [vmem:[%s164 + $0xd0] sm:$0xff] %v1948
        %2468 = vst [vmem:[%s164 + $0xd8] sm:$0xff] %v1953
        %2469 = vst [vmem:[%s164 + $0xe0] sm:$0xff] %v1958
        %2470 = vst [vmem:[%s164 + $0xe8] sm:$0xff] %v1963
        %2471 = vst [vmem:[%s164 + $0xf0] sm:$0xff] %v1968
        %2472 = vst [vmem:[%s164 + $0xf8] sm:$0xff] %v1973
        %2473 = vst [vmem:[%s164 + $0x100] sm:$0xff] %v1978
        %2474 = vst [vmem:[%s164 + $0x108] sm:$0xff] %v1983
        %2475 = vst [vmem:[%s164 + $0x110] sm:$0xff] %v1988
        %2476 = vst [vmem:[%s164 + $0x118] sm:$0xff] %v1993
        %2477 = vst [vmem:[%s164 + $0x120] sm:$0xff] %v1998
        %2478 = vst [vmem:[%s164 + $0x128] sm:$0xff] %v2003
        %2479 = vst [vmem:[%s164 + $0x130] sm:$0xff] %v2008
        %2480 = vst [vmem:[%s164 + $0x138] sm:$0xff] %v2013
        %2481 = vst [vmem:[%s164 + $0x140] sm:$0xff] %v2018
        %2482 = vst [vmem:[%s164 + $0x148] sm:$0xff] %v2023
        %2483 = vst [vmem:[%s164 + $0x150] sm:$0xff] %v2028
        %2484 = vst [vmem:[%s164 + $0x158] sm:$0xff] %v2033
        %2485 = vst [vmem:[%s164 + $0x160] sm:$0xff] %v2038
        %2486 = vst [vmem:[%s164 + $0x168] sm:$0xff] %v2043
        %2487 = vst [vmem:[%s164 + $0x170] sm:$0xff] %v2048
        %2488 = vst [vmem:[%s164 + $0x178] sm:$0xff] %v2053
        %2489 = vst [vmem:[%s164 + $0x180] sm:$0xff] %v2058
        %2490 = vst [vmem:[%s164 + $0x188] sm:$0xff] %v2063
        %2491 = vst [vmem:[%s164 + $0x190] sm:$0xff] %v2068
        %2492 = vst [vmem:[%s164 + $0x198] sm:$0xff] %v2073
        %2493 = vst [vmem:[%s164 + $0x1a0] sm:$0xff] %v2078
        %2494 = vst [vmem:[%s164 + $0x1a8] sm:$0xff] %v2083
        %2495 = vst [vmem:[%s164 + $0x1b0] sm:$0xff] %v2088
        %2496 = vst [vmem:[%s164 + $0x1b8] sm:$0xff] %v2093
        %2497 = vst [vmem:[%s164 + $0x1c0] sm:$0xff] %v2098
        %2498 = vst [vmem:[%s164 + $0x1c8] sm:$0xff] %v2103
        %2499 = vst [vmem:[%s164 + $0x1d0] sm:$0xff] %v2108
        %2500 = vst [vmem:[%s164 + $0x1d8] sm:$0xff] %v2113
        %2501 = vst [vmem:[%s164 + $0x1e0] sm:$0xff] %v2118
        %2502 = vst [vmem:[%s164 + $0x1e8] sm:$0xff] %v2123
        %2503 = vst [vmem:[%s164 + $0x1f0] sm:$0xff] %v2128
        %2504 = vst [vmem:[%s164 + $0x1f8] sm:$0xff] %v2133
        %2505 = vst [vmem:[%s164 + $0x200] sm:$0xff] %v2138
        %2506 = vst [vmem:[%s164 + $0x208] sm:$0xff] %v2143
        %2507 = vst [vmem:[%s164 + $0x210] sm:$0xff] %v2148
        %2508 = vst [vmem:[%s164 + $0x218] sm:$0xff] %v2153
        %2509 = vst [vmem:[%s164 + $0x220] sm:$0xff] %v2158
        %2510 = vst [vmem:[%s164 + $0x228] sm:$0xff] %v2163
        %2511 = vst [vmem:[%s164 + $0x230] sm:$0xff] %v2168
        %2512 = vst [vmem:[%s164 + $0x238] sm:$0xff] %v2173
        %2513 = vst [vmem:[%s164 + $0x240] sm:$0xff] %v2178
        %2514 = vst [vmem:[%s164 + $0x248] sm:$0xff] %v2183
        %2515 = vst [vmem:[%s164 + $0x250] sm:$0xff] %v2188
        %2516 = vst [vmem:[%s164 + $0x258] sm:$0xff] %v2193
        %2517 = vst [vmem:[%s164 + $0x260] sm:$0xff] %v2198
        %2518 = vst [vmem:[%s164 + $0x268] sm:$0xff] %v2203
        %2519 = vst [vmem:[%s164 + $0x270] sm:$0xff] %v2208
        %2520 = vst [vmem:[%s164 + $0x278] sm:$0xff] %v2213
        %2521 = vst [vmem:[%s164 + $0x280] sm:$0xff] %v2218
        %2522 = vst [vmem:[%s164 + $0x288] sm:$0xff] %v2223
        %2523 = vst [vmem:[%s164 + $0x290] sm:$0xff] %v2228
        %2524 = vst [vmem:[%s164 + $0x298] sm:$0xff] %v2233
        %2525 = vst [vmem:[%s164 + $0x2a0] sm:$0xff] %v2238
        %2526 = vst [vmem:[%s164 + $0x2a8] sm:$0xff] %v2243
        %2527 = vst [vmem:[%s164 + $0x2b0] sm:$0xff] %v2248
        %2528 = vst [vmem:[%s164 + $0x2b8] sm:$0xff] %v2253
        %2529 = vst [vmem:[%s164 + $0x2c0] sm:$0xff] %v2258
        %2530 = vst [vmem:[%s164 + $0x2c8] sm:$0xff] %v2263
        %2531 = vst [vmem:[%s164 + $0x2d0] sm:$0xff] %v2268
        %2532 = vst [vmem:[%s164 + $0x2d8] sm:$0xff] %v2273
        %2533 = vst [vmem:[%s164 + $0x2e0] sm:$0xff] %v2278
        %2534 = vst [vmem:[%s164 + $0x2e8] sm:$0xff] %v2283
        %2535 = vst [vmem:[%s164 + $0x2f0] sm:$0xff] %v2288
        %2536 = vst [vmem:[%s164 + $0x2f8] sm:$0xff] %v2293
        %2537 = vst [vmem:[%s164 + $0x300] sm:$0xff] %v2298
        %2538 = vst [vmem:[%s164 + $0x308] sm:$0xff] %v2303
        %2539 = vst [vmem:[%s164 + $0x310] sm:$0xff] %v2308
        %2540 = vst [vmem:[%s164 + $0x318] sm:$0xff] %v2313
        %2541 = vst [vmem:[%s164 + $0x320] sm:$0xff] %v2318
        %2542 = vst [vmem:[%s164 + $0x328] sm:$0xff] %v2323
        %2543 = vst [vmem:[%s164 + $0x330] sm:$0xff] %v2328
        %2544 = vst [vmem:[%s164 + $0x338] sm:$0xff] %v2333
        %2545 = vst [vmem:[%s164 + $0x340] sm:$0xff] %v2338
        %2546 = vst [vmem:[%s164 + $0x348] sm:$0xff] %v2343
        %2547 = vst [vmem:[%s164 + $0x350] sm:$0xff] %v2348
        %2548 = vst [vmem:[%s164 + $0x358] sm:$0xff] %v2353
        %2549 = vst [vmem:[%s164 + $0x360] sm:$0xff] %v2358
        %2550 = vst [vmem:[%s164 + $0x368] sm:$0xff] %v2363
        %2551 = vst [vmem:[%s164 + $0x370] sm:$0xff] %v2368
        %2552 = vst [vmem:[%s164 + $0x378] sm:$0xff] %v2373
        %2553 = vst [vmem:[%s164 + $0x380] sm:$0xff] %v2378
        %2554 = vst [vmem:[%s164 + $0x388] sm:$0xff] %v2383
        %2555 = vst [vmem:[%s164 + $0x390] sm:$0xff] %v2388
        %2556 = vst [vmem:[%s164 + $0x398] sm:$0xff] %v2393
        %2557 = vst [vmem:[%s164 + $0x3a0] sm:$0xff] %v2398
        %2558 = vst [vmem:[%s164 + $0x3a8] sm:$0xff] %v2403
        %2559 = vst [vmem:[%s164 + $0x3b0] sm:$0xff] %v2408
        %2560 = vst [vmem:[%s164 + $0x3b8] sm:$0xff] %v2413
        %2561 = vst [vmem:[%s164 + $0x3c0] sm:$0xff] %v2418
        %2562 = vst [vmem:[%s164 + $0x3c8] sm:$0xff] %v2423
        %2563 = vst [vmem:[%s164 + $0x3d0] sm:$0xff] %v2428
        %2564 = vst [vmem:[%s164 + $0x3d8] sm:$0xff] %v2433
        %2565 = vst [vmem:[%s164 + $0x3e0] sm:$0xff] %v2438
        %s2566 = sand.u32 %s93, 1
        %s2567 = scalar_lea.sflag [#allocation3], %s2566
        %s2568 = sand.u32 %s93, 1
        %s2569 = smul.addr %s2568, 1000
        %s2570 = scalar_lea.vmem [#allocation2], %s2569
        // Predicated region
        $region33: #{tpu_custom_call.1} parent=31 // pred_check
          %p2571 = pneg %p103
        $region34: #{tpu_custom_call.1} parent=31 // pred_check_branch
          %2573 = sbr.rel (%p2571) target = $region36
        $region35: #{tpu_custom_call.1} parent=31 // pred_region
          %s2574 = smul.u32 125, %s17
          %s2576 = ssub.s32 16000, 16000
          %2577 = vsyncadd %s2567, %s2576
          %s2578 = smul.addr %s2574, 128
          %s2579 = scalar_lea.hbm %s3, %s2578
          %s2580 = sshll.u32 %s2570, 4
          %s2581 = int_to_ptr.vmem [resolvable:$true] %s2580
          %2586 = dma.vmem_to_hbm [thread:$0]  %s2581, 16000, %s2579, %s2567, 128, 128, 8
        $region36: #{tpu_custom_call.1} parent=31 // pred_fallthru
          _
      $region32: #{tpu_custom_call.1} parent=5 // pred_fallthru
        _
      %p2587 = scmp.le.s32.totalorder 2, %s12
      // Predicated region
      $region37: #{tpu_custom_call.1} parent=5 // pred_check
        %p2588 = pneg %p2587
      $region38: #{tpu_custom_call.1} parent=5 // pred_check_branch
        %2590 = sbr.rel (%p2588) target = $region40
      $region39: #{tpu_custom_call.1} parent=5 // pred_region
        %s2591 = ssub.s32 %s12, 2
        // Predicated region
        $region41: #{tpu_custom_call.1} parent=39 // pred_check
          %p2592 = pneg %p109
        $region42: #{tpu_custom_call.1} parent=39 // pred_check_branch
          %2594 = sbr.rel (%p2592) target = $region44
        $region43: #{tpu_custom_call.1} parent=39 // pred_region
          %s2595 = sand.u32 %s94, 1
          %s2596 = scalar_lea.sflag [#allocation3], %s2595
          %s2597 = sand.u32 %s94, 1
          %s2598 = smul.addr %s2597, 1000
          %s2599 = scalar_lea.vmem [#allocation2], %s2598
          %2600 = dma.done %s2596, 16000
        $region44: #{tpu_custom_call.1} parent=39 // pred_fallthru
          _
      $region40: #{tpu_custom_call.1} parent=5 // pred_fallthru
        _
    $region6: #{tpu_custom_call.1} parent=1 // loop_footer
      %s16 = sadd.s32 1, %s12
    $region7: #{tpu_custom_call.1} parent=1 // loop_footer_branch
      %11 = sbr.rel target = $region3
    $region8: #{tpu_custom_call.1} parent=1 // loop_exit
      _
    %2601 = vsyncpa [#allocation3], 1
    %s2602 = scalar_lea.sflag [#allocation3], 1
    %2603 = vsyncpa %s2602, 1

</llo_original>
